<compile_context>
chip_gen: v5e
topology: v5e:2x2
jax: 0.10.0
libtpu: 0.0.40
codegen_flags: <defaults>
</compile_context>

<pallas_src>
import numpy as np
import jax
import jax.numpy as jnp
from jax import lax
from jax.experimental import pallas as pl
from jax.experimental.pallas import tpu as pltpu

# ---------------------------------------------------------------------------
# Geometry (LeNet-5 on 28x28 inputs)
# ---------------------------------------------------------------------------
_PAD_HW = 32                 # zero-padded input spatial size (28 + 2*2)
_C1_HW, _C1_C = 28, 6        # conv1 output spatial / channels
_P1_HW = 14                  # after 2x2 avg pool
_C2_HW, _C2_C = 10, 16       # conv2 output spatial / channels
_P2_HW = 5                   # after 2x2 avg pool
_K = 5                       # conv kernel size
_L1_IN = _P2_HW * _P2_HW * _C2_C   # 400
_N_CLASSES = 10

_C1_LANES = _C1_HW * _C1_C   # 168
_P1_LANES = _P1_HW * _C1_C   # 84
_C2_LANES = _C2_HW * _C2_C   # 160
_P2_LANES = _P2_HW * _C2_C   # 80


def _sigmoid(x):
    return 1.0 / (1.0 + jnp.exp(-x))


# ---------------------------------------------------------------------------
# Fused kernel: one image per grid step
# ---------------------------------------------------------------------------
def _lenet_kernel(x_ref, w1_ref, b1_ref, ph1_ref, g1_ref,
                  w2_ref, b2_ref, ph2_ref, g2_ref,
                  wl1_ref, bl1_ref, wl2_ref, bl2_ref, wl3_ref, bl3_ref,
                  o_ref, p1_ref, p2_ref):
    f32 = jnp.float32

    # ---- conv1 (1->6, 5x5, pad 2) as 5 row-shifted GEMMs --------------------
    # a1[oh, ow*6+co] = sum_kh  xpad[oh+kh, :] @ w1_struct[kh]
    a1 = jnp.dot(x_ref[0, 0:_C1_HW, :], w1_ref[0], preferred_element_type=f32)
    for kh in range(1, _K):
        a1 = a1 + jnp.dot(x_ref[0, kh:kh + _C1_HW, :], w1_ref[kh],
                          preferred_element_type=f32)
    s1 = _sigmoid(a1 + b1_ref[...])                         # (28, 168)

    # ---- 2x2 avg pool: row-pair matrix x channel-grouped column-pair matrix -
    p1_ref[...] = jnp.dot(
        jnp.dot(ph1_ref[...], s1, preferred_element_type=f32),
        g1_ref[...], preferred_element_type=f32)            # (14, 84)

    # ---- conv2 (6->16, 5x5, valid) ------------------------------------------
    a2 = jnp.dot(p1_ref[0:_C2_HW, :], w2_ref[0], preferred_element_type=f32)
    for kh in range(1, _K):
        a2 = a2 + jnp.dot(p1_ref[kh:kh + _C2_HW, :], w2_ref[kh],
                          preferred_element_type=f32)
    s2 = _sigmoid(a2 + b2_ref[...])                         # (10, 160)

    # ---- 2x2 avg pool -> (5, 80), lanes = j*16 + co --------------------------
    p2_ref[...] = jnp.dot(
        jnp.dot(ph2_ref[...], s2, preferred_element_type=f32),
        g2_ref[...], preferred_element_type=f32)            # (5, 80)

    # ---- flatten (PyTorch permutation folded into wl1) + linear_1 ------------
    z1 = bl1_ref[...]                                       # (1, 120)
    for i in range(_P2_HW):
        z1 = z1 + jnp.dot(p2_ref[i:i + 1, :],
                          wl1_ref[i * _P2_LANES:(i + 1) * _P2_LANES, :],
                          preferred_element_type=f32)
    h1 = _sigmoid(z1)

    # ---- linear_2 / linear_3 / softmax ---------------------------------------
    z2 = jnp.dot(h1, wl2_ref[...], preferred_element_type=f32) + bl2_ref[...]
    h2 = _sigmoid(z2)
    z3 = jnp.dot(h2, wl3_ref[...], preferred_element_type=f32) + bl3_ref[...]

    m = jnp.max(z3, axis=-1, keepdims=True)
    e = jnp.exp(z3 - m)
    o_ref[0] = e / jnp.sum(e, axis=-1, keepdims=True)       # (1, 10)


# ---------------------------------------------------------------------------
# One-time weight re-indexing (host side, numpy)
# ---------------------------------------------------------------------------
def _build_conv_row_gemm(w, out_w):
    """w: (Cout, Cin, K, K) -> (K, in_w*Cin, out_w*Cout) structured matrices.

    mats[kh, jj*Cin+ci, j*Cout+co] = w[co, ci, kh, jj-j]  for 0 <= jj-j < K,
    so that  out[i, j*Cout+co] = sum_kh  x[i+kh, :] @ mats[kh]
    with x laid out as (H, W*Cin), lanes = w_index*Cin + ci.
    """
    cout, cin, kk, _ = w.shape
    in_w = out_w + kk - 1
    mats = np.zeros((kk, in_w * cin, out_w * cout), np.float32)
    for kh in range(kk):
        for co in range(cout):
            for ci in range(cin):
                for j in range(out_w):
                    for kw in range(kk):
                        mats[kh, (j + kw) * cin + ci, j * cout + co] = \
                            w[co, ci, kh, kw]
    return mats


def _pool_row_mat(out_h):
    m = np.zeros((out_h, 2 * out_h), np.float32)
    for i in range(out_h):
        m[i, 2 * i] = 0.5
        m[i, 2 * i + 1] = 0.5
    return m


def _pool_col_mat(out_w, channels):
    m = np.zeros((2 * out_w * channels, out_w * channels), np.float32)
    for j in range(out_w):
        for dj in range(2):
            for c in range(channels):
                m[(2 * j + dj) * channels + c, j * channels + c] = 0.5
    return m


def build_kernel_weights(p):
    """Reindex PyTorch-layout params into the kernel's structured operands."""
    w1 = np.asarray(p["conv1_w"]); b1 = np.asarray(p["conv1_b"])
    w2 = np.asarray(p["conv2_w"]); b2 = np.asarray(p["conv2_b"])
    l1w = np.asarray(p["lin1_w"]); l1b = np.asarray(p["lin1_b"])
    l2w = np.asarray(p["lin2_w"]); l2b = np.asarray(p["lin2_b"])
    l3w = np.asarray(p["lin3_w"]); l3b = np.asarray(p["lin3_b"])

    conv1_mats = _build_conv_row_gemm(w1, _C1_HW)               # (5, 32, 168)
    conv1_bias = np.tile(b1, _C1_HW).reshape(1, _C1_LANES)      # (1, 168)
    conv2_mats = _build_conv_row_gemm(w2, _C2_HW)               # (5, 84, 160)
    conv2_bias = np.tile(b2, _C2_HW).reshape(1, _C2_LANES)      # (1, 160)

    ph1 = _pool_row_mat(_P1_HW)                                 # (14, 28)
    g1 = _pool_col_mat(_P1_HW, _C1_C)                           # (168, 84)
    ph2 = _pool_row_mat(_P2_HW)                                 # (5, 10)
    g2 = _pool_col_mat(_P2_HW, _C2_C)                           # (160, 80)

    # linear_1 with the PyTorch flatten permutation folded in:
    #   kernel flat index i*80 + j*16 + co  <->  torch flat index co*25 + i*5 + j
    wl1 = np.zeros((_L1_IN, 120), np.float32)
    for i in range(_P2_HW):
        for j in range(_P2_HW):
            for co in range(_C2_C):
                wl1[i * _P2_LANES + j * _C2_C + co, :] = \
                    l1w[:, co * 25 + i * 5 + j]

    ops = [conv1_mats, conv1_bias, ph1, g1,
           conv2_mats, conv2_bias, ph2, g2,
           wl1, l1b.reshape(1, 120),
           l2w.T.copy(), l2b.reshape(1, 84),
           l3w.T.copy(), l3b.reshape(1, 10)]
    return tuple(jnp.asarray(o, jnp.float32) for o in ops)


# ---------------------------------------------------------------------------
# pallas_call wrapper
# ---------------------------------------------------------------------------
def make_forward(n_batch, weight_shapes):
    def _const_map(ndim):
        return lambda n: (0,) * ndim

    in_specs = [pl.BlockSpec((1, _PAD_HW, _PAD_HW), lambda n: (n, 0, 0))]
    in_specs += [pl.BlockSpec(tuple(s), _const_map(len(s))) for s in weight_shapes]
    out_spec = pl.BlockSpec((1, 1, _N_CLASSES), lambda n: (n, 0, 0))

    call = pl.pallas_call(
        _lenet_kernel,
        out_shape=jax.ShapeDtypeStruct((n_batch, 1, _N_CLASSES), jnp.float32),
        grid=(n_batch,),
        in_specs=in_specs,
        out_specs=out_spec,
        scratch_shapes=[pltpu.VMEM((_P1_HW, _P1_LANES), jnp.float32),
                        pltpu.VMEM((_P2_HW, _P2_LANES), jnp.float32)],
        compiler_params=pltpu.CompilerParams(
            dimension_semantics=("parallel",)),
    )

    @jax.jit
    def forward(x_nchw, weights):
        x = x_nchw.reshape(n_batch, 28, 28)                  # Cin == 1
        xpad = jnp.pad(x, ((0, 0), (2, 2), (2, 2)))          # (N, 32, 32)
        out = call(xpad, *weights)
        return out.reshape(n_batch, _N_CLASSES)

    return forward


# ---------------------------------------------------------------------------
# Parameters (deterministic synthetic init, PyTorch shapes) + pure-JAX reference
# ---------------------------------------------------------------------------
def init_params(key):
    ks = jax.random.split(key, 10)
    return {
        "conv1_w": jax.random.normal(ks[0], (6, 1, 5, 5), jnp.float32) * 0.1,
        "conv1_b": jax.random.normal(ks[1], (6,), jnp.float32) * 0.1,
        "conv2_w": jax.random.normal(ks[2], (16, 6, 5, 5), jnp.float32) * 0.1,
        "conv2_b": jax.random.normal(ks[3], (16,), jnp.float32) * 0.1,
        "lin1_w": jax.random.normal(ks[4], (120, 400), jnp.float32) * 0.05,
        "lin1_b": jax.random.normal(ks[5], (120,), jnp.float32) * 0.05,
        "lin2_w": jax.random.normal(ks[6], (84, 120), jnp.float32) * 0.05,
        "lin2_b": jax.random.normal(ks[7], (84,), jnp.float32) * 0.05,
        "lin3_w": jax.random.normal(ks[8], (10, 84), jnp.float32) * 0.05,
        "lin3_b": jax.random.normal(ks[9], (10,), jnp.float32) * 0.05,
    }


def reference_forward(x_nchw, p):
    """Plain-JAX reference mirroring CNN_model.forward (for validation)."""
    z = lax.conv_general_dilated(
        x_nchw, p["conv1_w"], window_strides=(1, 1), padding=((2, 2), (2, 2)),
        dimension_numbers=("NCHW", "OIHW", "NCHW"))
    z = jax.nn.sigmoid(z + p["conv1_b"].reshape(1, -1, 1, 1))
    z = lax.reduce_window(z, 0.0, lax.add, (1, 1, 2, 2), (1, 1, 2, 2),
                          "VALID") * 0.25
    z = lax.conv_general_dilated(
        z, p["conv2_w"], window_strides=(1, 1), padding="VALID",
        dimension_numbers=("NCHW", "OIHW", "NCHW"))
    z = jax.nn.sigmoid(z + p["conv2_b"].reshape(1, -1, 1, 1))
    z = lax.reduce_window(z, 0.0, lax.add, (1, 1, 2, 2), (1, 1, 2, 2),
                          "VALID") * 0.25
    z = z.reshape(z.shape[0], -1)
    z = jax.nn.sigmoid(z @ p["lin1_w"].T + p["lin1_b"])
    z = jax.nn.sigmoid(z @ p["lin2_w"].T + p["lin2_b"])
    z = z @ p["lin3_w"].T + p["lin3_b"]
    return jax.nn.softmax(z, axis=-1)


if __name__ == "__main__":
    N_BATCH = 2
    key = jax.random.PRNGKey(0)
    k_param, k_x = jax.random.split(key)
    params = init_params(k_param)
    kernel_weights = build_kernel_weights(params)

    # 28x28 input is required by the architecture (16*5*5 flatten); batch=2.
    x = jax.random.normal(k_x, (N_BATCH, 1, 28, 28), jnp.float32)

    forward = make_forward(N_BATCH, [w.shape for w in kernel_weights])
    out = jax.block_until_ready(forward(x, kernel_weights))

    assert out.shape == (N_BATCH, 10)
    np.testing.assert_allclose(np.asarray(jnp.sum(out, axis=1)), 1.0, atol=1e-5)

    ref = np.asarray(reference_forward(x, params))
    np.testing.assert_allclose(np.asarray(out), ref, rtol=2e-3, atol=2e-4)
    print("KERNEL_OK")
</pallas_src>

<mosaic_0001>
module attributes {stable_mosaic.version = 11 : i64} {
  func.func @_lenet_kernel(%arg0: i32, %arg1: memref<1x32x32xf32, #tpu.memory_space<vmem>>, %arg2: memref<5x32x168xf32, #tpu.memory_space<vmem>>, %arg3: memref<1x168xf32, #tpu.memory_space<vmem>>, %arg4: memref<14x28xf32, #tpu.memory_space<vmem>>, %arg5: memref<168x84xf32, #tpu.memory_space<vmem>>, %arg6: memref<5x84x160xf32, #tpu.memory_space<vmem>>, %arg7: memref<1x160xf32, #tpu.memory_space<vmem>>, %arg8: memref<5x10xf32, #tpu.memory_space<vmem>>, %arg9: memref<160x80xf32, #tpu.memory_space<vmem>>, %arg10: memref<400x120xf32, #tpu.memory_space<vmem>>, %arg11: memref<1x120xf32, #tpu.memory_space<vmem>>, %arg12: memref<120x84xf32, #tpu.memory_space<vmem>>, %arg13: memref<1x84xf32, #tpu.memory_space<vmem>>, %arg14: memref<84x10xf32, #tpu.memory_space<vmem>>, %arg15: memref<1x10xf32, #tpu.memory_space<vmem>>, %arg16: memref<1x1x10xf32, #tpu.memory_space<vmem>>, %arg17: memref<14x84xf32, #tpu.memory_space<vmem>>, %arg18: memref<5x80xf32, #tpu.memory_space<vmem>>) attributes {dimension_semantics = [#tpu.dimension_semantics<parallel>], iteration_bounds = array<i64: 2>, scalar_prefetch = 0 : i64, scratch_operands = 2 : i64, tpu.core_type = #tpu.core_type<tc>, window_params = [{transform_indices = @transform_0, window_bounds = array<i64: 1, 32, 32>}, {pipeline_mode = #tpu.pipeline_mode<synchronous>, transform_indices = @transform_1, window_bounds = array<i64: 5, 32, 168>}, {pipeline_mode = #tpu.pipeline_mode<synchronous>, transform_indices = @transform_2, window_bounds = array<i64: 1, 168>}, {pipeline_mode = #tpu.pipeline_mode<synchronous>, transform_indices = @transform_3, window_bounds = array<i64: 14, 28>}, {pipeline_mode = #tpu.pipeline_mode<synchronous>, transform_indices = @transform_4, window_bounds = array<i64: 168, 84>}, {pipeline_mode = #tpu.pipeline_mode<synchronous>, transform_indices = @transform_5, window_bounds = array<i64: 5, 84, 160>}, {pipeline_mode = #tpu.pipeline_mode<synchronous>, transform_indices = @transform_6, window_bounds = array<i64: 1, 160>}, {pipeline_mode = #tpu.pipeline_mode<synchronous>, transform_indices = @transform_7, window_bounds = array<i64: 5, 10>}, {pipeline_mode = #tpu.pipeline_mode<synchronous>, transform_indices = @transform_8, window_bounds = array<i64: 160, 80>}, {pipeline_mode = #tpu.pipeline_mode<synchronous>, transform_indices = @transform_9, window_bounds = array<i64: 400, 120>}, {pipeline_mode = #tpu.pipeline_mode<synchronous>, transform_indices = @transform_10, window_bounds = array<i64: 1, 120>}, {pipeline_mode = #tpu.pipeline_mode<synchronous>, transform_indices = @transform_11, window_bounds = array<i64: 120, 84>}, {pipeline_mode = #tpu.pipeline_mode<synchronous>, transform_indices = @transform_12, window_bounds = array<i64: 1, 84>}, {pipeline_mode = #tpu.pipeline_mode<synchronous>, transform_indices = @transform_13, window_bounds = array<i64: 84, 10>}, {pipeline_mode = #tpu.pipeline_mode<synchronous>, transform_indices = @transform_14, window_bounds = array<i64: 1, 10>}, {transform_indices = @transform_15, window_bounds = array<i64: 1, 1, 10>}]} {
    %c0 = arith.constant 0 : index
    %c0_0 = arith.constant 0 : index
    %c0_1 = arith.constant 0 : index
    %0 = vector.load %arg1[%c0, %c0_0, %c0_1] : memref<1x32x32xf32, #tpu.memory_space<vmem>>, vector<1x28x32xf32>
    %1 = vector.shape_cast %0 : vector<1x28x32xf32> to vector<28x32xf32>
    %c0_2 = arith.constant 0 : index
    %c0_3 = arith.constant 0 : index
    %c0_4 = arith.constant 0 : index
    %2 = vector.load %arg2[%c0_2, %c0_3, %c0_4] : memref<5x32x168xf32, #tpu.memory_space<vmem>>, vector<1x32x168xf32>
    %3 = vector.shape_cast %2 : vector<1x32x168xf32> to vector<32x168xf32>
    %cst = arith.constant dense<0.000000e+00> : vector<28x168xf32>
    %4 = tpu.matmul %1, %3, %cst {dimension_numbers = #tpu.dot_dimension_numbers<[1], [0], [0], [1], [0, 0, 1, 1], [], []>} : vector<28x32xf32>, vector<32x168xf32>, vector<28x168xf32> -> vector<28x168xf32>
    %c0_5 = arith.constant 0 : index
    %c1 = arith.constant 1 : index
    %c0_6 = arith.constant 0 : index
    %5 = vector.load %arg1[%c0_5, %c1, %c0_6] : memref<1x32x32xf32, #tpu.memory_space<vmem>>, vector<1x28x32xf32>
    %6 = vector.shape_cast %5 : vector<1x28x32xf32> to vector<28x32xf32>
    %c1_7 = arith.constant 1 : index
    %c0_8 = arith.constant 0 : index
    %c0_9 = arith.constant 0 : index
    %7 = vector.load %arg2[%c1_7, %c0_8, %c0_9] : memref<5x32x168xf32, #tpu.memory_space<vmem>>, vector<1x32x168xf32>
    %8 = vector.shape_cast %7 : vector<1x32x168xf32> to vector<32x168xf32>
    %cst_10 = arith.constant dense<0.000000e+00> : vector<28x168xf32>
    %9 = tpu.matmul %6, %8, %cst_10 {dimension_numbers = #tpu.dot_dimension_numbers<[1], [0], [0], [1], [0, 0, 1, 1], [], []>} : vector<28x32xf32>, vector<32x168xf32>, vector<28x168xf32> -> vector<28x168xf32>
    %10 = arith.addf %4, %9 : vector<28x168xf32>
    %c0_11 = arith.constant 0 : index
    %c2 = arith.constant 2 : index
    %c0_12 = arith.constant 0 : index
    %11 = vector.load %arg1[%c0_11, %c2, %c0_12] : memref<1x32x32xf32, #tpu.memory_space<vmem>>, vector<1x28x32xf32>
    %12 = vector.shape_cast %11 : vector<1x28x32xf32> to vector<28x32xf32>
    %c2_13 = arith.constant 2 : index
    %c0_14 = arith.constant 0 : index
    %c0_15 = arith.constant 0 : index
    %13 = vector.load %arg2[%c2_13, %c0_14, %c0_15] : memref<5x32x168xf32, #tpu.memory_space<vmem>>, vector<1x32x168xf32>
    %14 = vector.shape_cast %13 : vector<1x32x168xf32> to vector<32x168xf32>
    %cst_16 = arith.constant dense<0.000000e+00> : vector<28x168xf32>
    %15 = tpu.matmul %12, %14, %cst_16 {dimension_numbers = #tpu.dot_dimension_numbers<[1], [0], [0], [1], [0, 0, 1, 1], [], []>} : vector<28x32xf32>, vector<32x168xf32>, vector<28x168xf32> -> vector<28x168xf32>
    %16 = arith.addf %10, %15 : vector<28x168xf32>
    %c0_17 = arith.constant 0 : index
    %c3 = arith.constant 3 : index
    %c0_18 = arith.constant 0 : index
    %17 = vector.load %arg1[%c0_17, %c3, %c0_18] : memref<1x32x32xf32, #tpu.memory_space<vmem>>, vector<1x28x32xf32>
    %18 = vector.shape_cast %17 : vector<1x28x32xf32> to vector<28x32xf32>
    %c3_19 = arith.constant 3 : index
    %c0_20 = arith.constant 0 : index
    %c0_21 = arith.constant 0 : index
    %19 = vector.load %arg2[%c3_19, %c0_20, %c0_21] : memref<5x32x168xf32, #tpu.memory_space<vmem>>, vector<1x32x168xf32>
    %20 = vector.shape_cast %19 : vector<1x32x168xf32> to vector<32x168xf32>
    %cst_22 = arith.constant dense<0.000000e+00> : vector<28x168xf32>
    %21 = tpu.matmul %18, %20, %cst_22 {dimension_numbers = #tpu.dot_dimension_numbers<[1], [0], [0], [1], [0, 0, 1, 1], [], []>} : vector<28x32xf32>, vector<32x168xf32>, vector<28x168xf32> -> vector<28x168xf32>
    %22 = arith.addf %16, %21 : vector<28x168xf32>
    %c0_23 = arith.constant 0 : index
    %c4 = arith.constant 4 : index
    %c0_24 = arith.constant 0 : index
    %23 = vector.load %arg1[%c0_23, %c4, %c0_24] : memref<1x32x32xf32, #tpu.memory_space<vmem>>, vector<1x28x32xf32>
    %24 = vector.shape_cast %23 : vector<1x28x32xf32> to vector<28x32xf32>
    %c4_25 = arith.constant 4 : index
    %c0_26 = arith.constant 0 : index
    %c0_27 = arith.constant 0 : index
    %25 = vector.load %arg2[%c4_25, %c0_26, %c0_27] : memref<5x32x168xf32, #tpu.memory_space<vmem>>, vector<1x32x168xf32>
    %26 = vector.shape_cast %25 : vector<1x32x168xf32> to vector<32x168xf32>
    %cst_28 = arith.constant dense<0.000000e+00> : vector<28x168xf32>
    %27 = tpu.matmul %24, %26, %cst_28 {dimension_numbers = #tpu.dot_dimension_numbers<[1], [0], [0], [1], [0, 0, 1, 1], [], []>} : vector<28x32xf32>, vector<32x168xf32>, vector<28x168xf32> -> vector<28x168xf32>
    %28 = arith.addf %22, %27 : vector<28x168xf32>
    %c0_29 = arith.constant 0 : index
    %c0_30 = arith.constant 0 : index
    %29 = vector.load %arg3[%c0_29, %c0_30] : memref<1x168xf32, #tpu.memory_space<vmem>>, vector<1x168xf32>
    %30 = vector.broadcast %29 : vector<1x168xf32> to vector<28x168xf32>
    %31 = arith.addf %28, %30 : vector<28x168xf32>
    %cst_31 = arith.constant 0.000000e+00 : f32
    %32 = vector.broadcast %cst_31 : f32 to vector<28x168xf32>
    %33 = arith.subf %32, %31 : vector<28x168xf32>
    %34 = math.exp %33 : vector<28x168xf32>
    %cst_32 = arith.constant 1.000000e+00 : f32
    %35 = vector.broadcast %cst_32 : f32 to vector<28x168xf32>
    %36 = arith.addf %35, %34 : vector<28x168xf32>
    %cst_33 = arith.constant 1.000000e+00 : f32
    %37 = vector.broadcast %cst_33 : f32 to vector<28x168xf32>
    %38 = arith.divf %37, %36 : vector<28x168xf32>
    %c0_34 = arith.constant 0 : index
    %c0_35 = arith.constant 0 : index
    %39 = vector.load %arg4[%c0_34, %c0_35] : memref<14x28xf32, #tpu.memory_space<vmem>>, vector<14x28xf32>
    %cst_36 = arith.constant dense<0.000000e+00> : vector<14x168xf32>
    %40 = tpu.matmul %39, %38, %cst_36 {dimension_numbers = #tpu.dot_dimension_numbers<[1], [0], [0], [1], [0, 0, 1, 1], [], []>} : vector<14x28xf32>, vector<28x168xf32>, vector<14x168xf32> -> vector<14x168xf32>
    %c0_37 = arith.constant 0 : index
    %c0_38 = arith.constant 0 : index
    %41 = vector.load %arg5[%c0_37, %c0_38] : memref<168x84xf32, #tpu.memory_space<vmem>>, vector<168x84xf32>
    %cst_39 = arith.constant dense<0.000000e+00> : vector<14x84xf32>
    %42 = tpu.matmul %40, %41, %cst_39 {dimension_numbers = #tpu.dot_dimension_numbers<[1], [0], [0], [1], [0, 0, 1, 1], [], []>} : vector<14x168xf32>, vector<168x84xf32>, vector<14x84xf32> -> vector<14x84xf32>
    %c0_40 = arith.constant 0 : index
    %c0_41 = arith.constant 0 : index
    %43 = vector.load %arg17[%c0_40, %c0_41] : memref<14x84xf32, #tpu.memory_space<vmem>>, vector<14x84xf32>
    tpu.vector_store %arg17[%c0_40, %c0_41], %42 {strides = array<i32>} : memref<14x84xf32, #tpu.memory_space<vmem>>, vector<14x84xf32>,
    %c0_42 = arith.constant 0 : index
    %c0_43 = arith.constant 0 : index
    %44 = vector.load %arg17[%c0_42, %c0_43] : memref<14x84xf32, #tpu.memory_space<vmem>>, vector<10x84xf32>
    %c0_44 = arith.constant 0 : index
    %c0_45 = arith.constant 0 : index
    %c0_46 = arith.constant 0 : index
    %45 = vector.load %arg6[%c0_44, %c0_45, %c0_46] : memref<5x84x160xf32, #tpu.memory_space<vmem>>, vector<1x84x160xf32>
    %46 = vector.shape_cast %45 : vector<1x84x160xf32> to vector<84x160xf32>
    %cst_47 = arith.constant dense<0.000000e+00> : vector<10x160xf32>
    %47 = tpu.matmul %44, %46, %cst_47 {dimension_numbers = #tpu.dot_dimension_numbers<[1], [0], [0], [1], [0, 0, 1, 1], [], []>} : vector<10x84xf32>, vector<84x160xf32>, vector<10x160xf32> -> vector<10x160xf32>
    %c1_48 = arith.constant 1 : index
    %c0_49 = arith.constant 0 : index
    %48 = vector.load %arg17[%c1_48, %c0_49] : memref<14x84xf32, #tpu.memory_space<vmem>>, vector<10x84xf32>
    %c1_50 = arith.constant 1 : index
    %c0_51 = arith.constant 0 : index
    %c0_52 = arith.constant 0 : index
    %49 = vector.load %arg6[%c1_50, %c0_51, %c0_52] : memref<5x84x160xf32, #tpu.memory_space<vmem>>, vector<1x84x160xf32>
    %50 = vector.shape_cast %49 : vector<1x84x160xf32> to vector<84x160xf32>
    %cst_53 = arith.constant dense<0.000000e+00> : vector<10x160xf32>
    %51 = tpu.matmul %48, %50, %cst_53 {dimension_numbers = #tpu.dot_dimension_numbers<[1], [0], [0], [1], [0, 0, 1, 1], [], []>} : vector<10x84xf32>, vector<84x160xf32>, vector<10x160xf32> -> vector<10x160xf32>
    %52 = arith.addf %47, %51 : vector<10x160xf32>
    %c2_54 = arith.constant 2 : index
    %c0_55 = arith.constant 0 : index
    %53 = vector.load %arg17[%c2_54, %c0_55] : memref<14x84xf32, #tpu.memory_space<vmem>>, vector<10x84xf32>
    %c2_56 = arith.constant 2 : index
    %c0_57 = arith.constant 0 : index
    %c0_58 = arith.constant 0 : index
    %54 = vector.load %arg6[%c2_56, %c0_57, %c0_58] : memref<5x84x160xf32, #tpu.memory_space<vmem>>, vector<1x84x160xf32>
    %55 = vector.shape_cast %54 : vector<1x84x160xf32> to vector<84x160xf32>
    %cst_59 = arith.constant dense<0.000000e+00> : vector<10x160xf32>
    %56 = tpu.matmul %53, %55, %cst_59 {dimension_numbers = #tpu.dot_dimension_numbers<[1], [0], [0], [1], [0, 0, 1, 1], [], []>} : vector<10x84xf32>, vector<84x160xf32>, vector<10x160xf32> -> vector<10x160xf32>
    %57 = arith.addf %52, %56 : vector<10x160xf32>
    %c3_60 = arith.constant 3 : index
    %c0_61 = arith.constant 0 : index
    %58 = vector.load %arg17[%c3_60, %c0_61] : memref<14x84xf32, #tpu.memory_space<vmem>>, vector<10x84xf32>
    %c3_62 = arith.constant 3 : index
    %c0_63 = arith.constant 0 : index
    %c0_64 = arith.constant 0 : index
    %59 = vector.load %arg6[%c3_62, %c0_63, %c0_64] : memref<5x84x160xf32, #tpu.memory_space<vmem>>, vector<1x84x160xf32>
    %60 = vector.shape_cast %59 : vector<1x84x160xf32> to vector<84x160xf32>
    %cst_65 = arith.constant dense<0.000000e+00> : vector<10x160xf32>
    %61 = tpu.matmul %58, %60, %cst_65 {dimension_numbers = #tpu.dot_dimension_numbers<[1], [0], [0], [1], [0, 0, 1, 1], [], []>} : vector<10x84xf32>, vector<84x160xf32>, vector<10x160xf32> -> vector<10x160xf32>
    %62 = arith.addf %57, %61 : vector<10x160xf32>
    %c4_66 = arith.constant 4 : index
    %c0_67 = arith.constant 0 : index
    %63 = vector.load %arg17[%c4_66, %c0_67] : memref<14x84xf32, #tpu.memory_space<vmem>>, vector<10x84xf32>
    %c4_68 = arith.constant 4 : index
    %c0_69 = arith.constant 0 : index
    %c0_70 = arith.constant 0 : index
    %64 = vector.load %arg6[%c4_68, %c0_69, %c0_70] : memref<5x84x160xf32, #tpu.memory_space<vmem>>, vector<1x84x160xf32>
    %65 = vector.shape_cast %64 : vector<1x84x160xf32> to vector<84x160xf32>
    %cst_71 = arith.constant dense<0.000000e+00> : vector<10x160xf32>
    %66 = tpu.matmul %63, %65, %cst_71 {dimension_numbers = #tpu.dot_dimension_numbers<[1], [0], [0], [1], [0, 0, 1, 1], [], []>} : vector<10x84xf32>, vector<84x160xf32>, vector<10x160xf32> -> vector<10x160xf32>
    %67 = arith.addf %62, %66 : vector<10x160xf32>
    %c0_72 = arith.constant 0 : index
    %c0_73 = arith.constant 0 : index
    %68 = vector.load %arg7[%c0_72, %c0_73] : memref<1x160xf32, #tpu.memory_space<vmem>>, vector<1x160xf32>
    %69 = vector.broadcast %68 : vector<1x160xf32> to vector<10x160xf32>
    %70 = arith.addf %67, %69 : vector<10x160xf32>
    %cst_74 = arith.constant 0.000000e+00 : f32
    %71 = vector.broadcast %cst_74 : f32 to vector<10x160xf32>
    %72 = arith.subf %71, %70 : vector<10x160xf32>
    %73 = math.exp %72 : vector<10x160xf32>
    %cst_75 = arith.constant 1.000000e+00 : f32
    %74 = vector.broadcast %cst_75 : f32 to vector<10x160xf32>
    %75 = arith.addf %74, %73 : vector<10x160xf32>
    %cst_76 = arith.constant 1.000000e+00 : f32
    %76 = vector.broadcast %cst_76 : f32 to vector<10x160xf32>
    %77 = arith.divf %76, %75 : vector<10x160xf32>
    %c0_77 = arith.constant 0 : index
    %c0_78 = arith.constant 0 : index
    %78 = vector.load %arg8[%c0_77, %c0_78] : memref<5x10xf32, #tpu.memory_space<vmem>>, vector<5x10xf32>
    %cst_79 = arith.constant dense<0.000000e+00> : vector<5x160xf32>
    %79 = tpu.matmul %78, %77, %cst_79 {dimension_numbers = #tpu.dot_dimension_numbers<[1], [0], [0], [1], [0, 0, 1, 1], [], []>} : vector<5x10xf32>, vector<10x160xf32>, vector<5x160xf32> -> vector<5x160xf32>
    %c0_80 = arith.constant 0 : index
    %c0_81 = arith.constant 0 : index
    %80 = vector.load %arg9[%c0_80, %c0_81] : memref<160x80xf32, #tpu.memory_space<vmem>>, vector<160x80xf32>
    %cst_82 = arith.constant dense<0.000000e+00> : vector<5x80xf32>
    %81 = tpu.matmul %79, %80, %cst_82 {dimension_numbers = #tpu.dot_dimension_numbers<[1], [0], [0], [1], [0, 0, 1, 1], [], []>} : vector<5x160xf32>, vector<160x80xf32>, vector<5x80xf32> -> vector<5x80xf32>
    %c0_83 = arith.constant 0 : index
    %c0_84 = arith.constant 0 : index
    %82 = vector.load %arg18[%c0_83, %c0_84] : memref<5x80xf32, #tpu.memory_space<vmem>>, vector<5x80xf32>
    tpu.vector_store %arg18[%c0_83, %c0_84], %81 {strides = array<i32>} : memref<5x80xf32, #tpu.memory_space<vmem>>, vector<5x80xf32>,
    %c0_85 = arith.constant 0 : index
    %c0_86 = arith.constant 0 : index
    %83 = vector.load %arg11[%c0_85, %c0_86] : memref<1x120xf32, #tpu.memory_space<vmem>>, vector<1x120xf32>
    %c0_87 = arith.constant 0 : index
    %c0_88 = arith.constant 0 : index
    %84 = vector.load %arg18[%c0_87, %c0_88] : memref<5x80xf32, #tpu.memory_space<vmem>>, vector<1x80xf32>
    %c0_89 = arith.constant 0 : index
    %c0_90 = arith.constant 0 : index
    %85 = vector.load %arg10[%c0_89, %c0_90] : memref<400x120xf32, #tpu.memory_space<vmem>>, vector<80x120xf32>
    %cst_91 = arith.constant dense<0.000000e+00> : vector<1x120xf32>
    %86 = tpu.matmul %84, %85, %cst_91 {dimension_numbers = #tpu.dot_dimension_numbers<[1], [0], [0], [1], [0, 0, 1, 1], [], []>} : vector<1x80xf32>, vector<80x120xf32>, vector<1x120xf32> -> vector<1x120xf32>
    %87 = arith.addf %83, %86 : vector<1x120xf32>
    %c1_92 = arith.constant 1 : index
    %c0_93 = arith.constant 0 : index
    %88 = vector.load %arg18[%c1_92, %c0_93] : memref<5x80xf32, #tpu.memory_space<vmem>>, vector<1x80xf32>
    %c80 = arith.constant 80 : index
    %c0_94 = arith.constant 0 : index
    %89 = vector.load %arg10[%c80, %c0_94] : memref<400x120xf32, #tpu.memory_space<vmem>>, vector<80x120xf32>
    %cst_95 = arith.constant dense<0.000000e+00> : vector<1x120xf32>
    %90 = tpu.matmul %88, %89, %cst_95 {dimension_numbers = #tpu.dot_dimension_numbers<[1], [0], [0], [1], [0, 0, 1, 1], [], []>} : vector<1x80xf32>, vector<80x120xf32>, vector<1x120xf32> -> vector<1x120xf32>
    %91 = arith.addf %87, %90 : vector<1x120xf32>
    %c2_96 = arith.constant 2 : index
    %c0_97 = arith.constant 0 : index
    %92 = vector.load %arg18[%c2_96, %c0_97] : memref<5x80xf32, #tpu.memory_space<vmem>>, vector<1x80xf32>
    %c160 = arith.constant 160 : index
    %c0_98 = arith.constant 0 : index
    %93 = vector.load %arg10[%c160, %c0_98] : memref<400x120xf32, #tpu.memory_space<vmem>>, vector<80x120xf32>
    %cst_99 = arith.constant dense<0.000000e+00> : vector<1x120xf32>
    %94 = tpu.matmul %92, %93, %cst_99 {dimension_numbers = #tpu.dot_dimension_numbers<[1], [0], [0], [1], [0, 0, 1, 1], [], []>} : vector<1x80xf32>, vector<80x120xf32>, vector<1x120xf32> -> vector<1x120xf32>
    %95 = arith.addf %91, %94 : vector<1x120xf32>
    %c3_100 = arith.constant 3 : index
    %c0_101 = arith.constant 0 : index
    %96 = vector.load %arg18[%c3_100, %c0_101] : memref<5x80xf32, #tpu.memory_space<vmem>>, vector<1x80xf32>
    %c240 = arith.constant 240 : index
    %c0_102 = arith.constant 0 : index
    %97 = vector.load %arg10[%c240, %c0_102] : memref<400x120xf32, #tpu.memory_space<vmem>>, vector<80x120xf32>
    %cst_103 = arith.constant dense<0.000000e+00> : vector<1x120xf32>
    %98 = tpu.matmul %96, %97, %cst_103 {dimension_numbers = #tpu.dot_dimension_numbers<[1], [0], [0], [1], [0, 0, 1, 1], [], []>} : vector<1x80xf32>, vector<80x120xf32>, vector<1x120xf32> -> vector<1x120xf32>
    %99 = arith.addf %95, %98 : vector<1x120xf32>
    %c4_104 = arith.constant 4 : index
    %c0_105 = arith.constant 0 : index
    %100 = vector.load %arg18[%c4_104, %c0_105] : memref<5x80xf32, #tpu.memory_space<vmem>>, vector<1x80xf32>
    %c320 = arith.constant 320 : index
    %c0_106 = arith.constant 0 : index
    %101 = vector.load %arg10[%c320, %c0_106] : memref<400x120xf32, #tpu.memory_space<vmem>>, vector<80x120xf32>
    %cst_107 = arith.constant dense<0.000000e+00> : vector<1x120xf32>
    %102 = tpu.matmul %100, %101, %cst_107 {dimension_numbers = #tpu.dot_dimension_numbers<[1], [0], [0], [1], [0, 0, 1, 1], [], []>} : vector<1x80xf32>, vector<80x120xf32>, vector<1x120xf32> -> vector<1x120xf32>
    %103 = arith.addf %99, %102 : vector<1x120xf32>
    %cst_108 = arith.constant 0.000000e+00 : f32
    %104 = vector.broadcast %cst_108 : f32 to vector<1x120xf32>
    %105 = arith.subf %104, %103 : vector<1x120xf32>
    %106 = math.exp %105 : vector<1x120xf32>
    %cst_109 = arith.constant 1.000000e+00 : f32
    %107 = vector.broadcast %cst_109 : f32 to vector<1x120xf32>
    %108 = arith.addf %107, %106 : vector<1x120xf32>
    %cst_110 = arith.constant 1.000000e+00 : f32
    %109 = vector.broadcast %cst_110 : f32 to vector<1x120xf32>
    %110 = arith.divf %109, %108 : vector<1x120xf32>
    %c0_111 = arith.constant 0 : index
    %c0_112 = arith.constant 0 : index
    %111 = vector.load %arg12[%c0_111, %c0_112] : memref<120x84xf32, #tpu.memory_space<vmem>>, vector<120x84xf32>
    %cst_113 = arith.constant dense<0.000000e+00> : vector<1x84xf32>
    %112 = tpu.matmul %110, %111, %cst_113 {dimension_numbers = #tpu.dot_dimension_numbers<[1], [0], [0], [1], [0, 0, 1, 1], [], []>} : vector<1x120xf32>, vector<120x84xf32>, vector<1x84xf32> -> vector<1x84xf32>
    %c0_114 = arith.constant 0 : index
    %c0_115 = arith.constant 0 : index
    %113 = vector.load %arg13[%c0_114, %c0_115] : memref<1x84xf32, #tpu.memory_space<vmem>>, vector<1x84xf32>
    %114 = arith.addf %112, %113 : vector<1x84xf32>
    %cst_116 = arith.constant 0.000000e+00 : f32
    %115 = vector.broadcast %cst_116 : f32 to vector<1x84xf32>
    %116 = arith.subf %115, %114 : vector<1x84xf32>
    %117 = math.exp %116 : vector<1x84xf32>
    %cst_117 = arith.constant 1.000000e+00 : f32
    %118 = vector.broadcast %cst_117 : f32 to vector<1x84xf32>
    %119 = arith.addf %118, %117 : vector<1x84xf32>
    %cst_118 = arith.constant 1.000000e+00 : f32
    %120 = vector.broadcast %cst_118 : f32 to vector<1x84xf32>
    %121 = arith.divf %120, %119 : vector<1x84xf32>
    %c0_119 = arith.constant 0 : index
    %c0_120 = arith.constant 0 : index
    %122 = vector.load %arg14[%c0_119, %c0_120] : memref<84x10xf32, #tpu.memory_space<vmem>>, vector<84x10xf32>
    %cst_121 = arith.constant dense<0.000000e+00> : vector<1x10xf32>
    %123 = tpu.matmul %121, %122, %cst_121 {dimension_numbers = #tpu.dot_dimension_numbers<[1], [0], [0], [1], [0, 0, 1, 1], [], []>} : vector<1x84xf32>, vector<84x10xf32>, vector<1x10xf32> -> vector<1x10xf32>
    %c0_122 = arith.constant 0 : index
    %c0_123 = arith.constant 0 : index
    %124 = vector.load %arg15[%c0_122, %c0_123] : memref<1x10xf32, #tpu.memory_space<vmem>>, vector<1x10xf32>
    %125 = arith.addf %123, %124 : vector<1x10xf32>
    %cst_124 = arith.constant dense<0xFF800000> : vector<1xf32>
    %126 = vector.multi_reduction <maximumf>, %125, %cst_124 [1] : vector<1x10xf32> to vector<1xf32>
    %127 = vector.shape_cast %126 : vector<1xf32> to vector<1x1xf32>
    %128 = vector.broadcast %127 : vector<1x1xf32> to vector<1x10xf32>
    %129 = arith.subf %125, %128 : vector<1x10xf32>
    %130 = math.exp %129 : vector<1x10xf32>
    %cst_125 = arith.constant dense<0.000000e+00> : vector<1xf32>
    %131 = vector.multi_reduction <add>, %130, %cst_125 [1] : vector<1x10xf32> to vector<1xf32>
    %132 = vector.shape_cast %131 : vector<1xf32> to vector<1x1xf32>
    %133 = vector.broadcast %132 : vector<1x1xf32> to vector<1x10xf32>
    %134 = arith.divf %130, %133 : vector<1x10xf32>
    %c0_126 = arith.constant 0 : index
    %c0_127 = arith.constant 0 : index
    %c0_128 = arith.constant 0 : index
    %135 = vector.load %arg16[%c0_126, %c0_127, %c0_128] : memref<1x1x10xf32, #tpu.memory_space<vmem>>, vector<1x1x10xf32>
    %136 = vector.shape_cast %135 : vector<1x1x10xf32> to vector<1x10xf32>
    %137 = vector.shape_cast %134 : vector<1x10xf32> to vector<1x1x10xf32>
    tpu.vector_store %arg16[%c0_126, %c0_127, %c0_128], %137 {strides = array<i32>} : memref<1x1x10xf32, #tpu.memory_space<vmem>>, vector<1x1x10xf32>,
    return
  }
  func.func @transform_0(%arg0: i32) -> (i32, i32, i32) {
    %c0_i32 = arith.constant 0 : i32
    %c0_i32_0 = arith.constant 0 : i32
    %c0_i32_1 = arith.constant 0 : i32
    return %arg0, %c0_i32, %c0_i32_0 : i32, i32, i32
  }
  func.func @transform_1(%arg0: i32) -> (i32, i32, i32) {
    %c0_i32 = arith.constant 0 : i32
    %c0_i32_0 = arith.constant 0 : i32
    %c0_i32_1 = arith.constant 0 : i32
    %c0_i32_2 = arith.constant 0 : i32
    return %c0_i32, %c0_i32_0, %c0_i32_1 : i32, i32, i32
  }
  func.func @transform_2(%arg0: i32) -> (i32, i32) {
    %c0_i32 = arith.constant 0 : i32
    %c0_i32_0 = arith.constant 0 : i32
    %c0_i32_1 = arith.constant 0 : i32
    return %c0_i32, %c0_i32_0 : i32, i32
  }
  func.func @transform_3(%arg0: i32) -> (i32, i32) {
    %c0_i32 = arith.constant 0 : i32
    %c0_i32_0 = arith.constant 0 : i32
    %c0_i32_1 = arith.constant 0 : i32
    return %c0_i32, %c0_i32_0 : i32, i32
  }
  func.func @transform_4(%arg0: i32) -> (i32, i32) {
    %c0_i32 = arith.constant 0 : i32
    %c0_i32_0 = arith.constant 0 : i32
    %c0_i32_1 = arith.constant 0 : i32
    return %c0_i32, %c0_i32_0 : i32, i32
  }
  func.func @transform_5(%arg0: i32) -> (i32, i32, i32) {
    %c0_i32 = arith.constant 0 : i32
    %c0_i32_0 = arith.constant 0 : i32
    %c0_i32_1 = arith.constant 0 : i32
    %c0_i32_2 = arith.constant 0 : i32
    return %c0_i32, %c0_i32_0, %c0_i32_1 : i32, i32, i32
  }
  func.func @transform_6(%arg0: i32) -> (i32, i32) {
    %c0_i32 = arith.constant 0 : i32
    %c0_i32_0 = arith.constant 0 : i32
    %c0_i32_1 = arith.constant 0 : i32
    return %c0_i32, %c0_i32_0 : i32, i32
  }
  func.func @transform_7(%arg0: i32) -> (i32, i32) {
    %c0_i32 = arith.constant 0 : i32
    %c0_i32_0 = arith.constant 0 : i32
    %c0_i32_1 = arith.constant 0 : i32
    return %c0_i32, %c0_i32_0 : i32, i32
  }
  func.func @transform_8(%arg0: i32) -> (i32, i32) {
    %c0_i32 = arith.constant 0 : i32
    %c0_i32_0 = arith.constant 0 : i32
    %c0_i32_1 = arith.constant 0 : i32
    return %c0_i32, %c0_i32_0 : i32, i32
  }
  func.func @transform_9(%arg0: i32) -> (i32, i32) {
    %c0_i32 = arith.constant 0 : i32
    %c0_i32_0 = arith.constant 0 : i32
    %c0_i32_1 = arith.constant 0 : i32
    return %c0_i32, %c0_i32_0 : i32, i32
  }
  func.func @transform_10(%arg0: i32) -> (i32, i32) {
    %c0_i32 = arith.constant 0 : i32
    %c0_i32_0 = arith.constant 0 : i32
    %c0_i32_1 = arith.constant 0 : i32
    return %c0_i32, %c0_i32_0 : i32, i32
  }
  func.func @transform_11(%arg0: i32) -> (i32, i32) {
    %c0_i32 = arith.constant 0 : i32
    %c0_i32_0 = arith.constant 0 : i32
    %c0_i32_1 = arith.constant 0 : i32
    return %c0_i32, %c0_i32_0 : i32, i32
  }
  func.func @transform_12(%arg0: i32) -> (i32, i32) {
    %c0_i32 = arith.constant 0 : i32
    %c0_i32_0 = arith.constant 0 : i32
    %c0_i32_1 = arith.constant 0 : i32
    return %c0_i32, %c0_i32_0 : i32, i32
  }
  func.func @transform_13(%arg0: i32) -> (i32, i32) {
    %c0_i32 = arith.constant 0 : i32
    %c0_i32_0 = arith.constant 0 : i32
    %c0_i32_1 = arith.constant 0 : i32
    return %c0_i32, %c0_i32_0 : i32, i32
  }
  func.func @transform_14(%arg0: i32) -> (i32, i32) {
    %c0_i32 = arith.constant 0 : i32
    %c0_i32_0 = arith.constant 0 : i32
    %c0_i32_1 = arith.constant 0 : i32
    return %c0_i32, %c0_i32_0 : i32, i32
  }
  func.func @transform_15(%arg0: i32) -> (i32, i32, i32) {
    %c0_i32 = arith.constant 0 : i32
    %c0_i32_0 = arith.constant 0 : i32
    %c0_i32_1 = arith.constant 0 : i32
    return %arg0, %c0_i32, %c0_i32_0 : i32, i32, i32
  }
}

</mosaic_0001>

<llo_original>
// kernel: forward.1
$region0: #{forward.1}
  #allocation0 [shape = 'u32[]', space=smem, size = 0x4, offset = 0x4, fixed_abs, tag = 'smem constant byte address 0x4 - core index']
  #allocation1 [shape = 'u32[72,128]{1,0:T(1,128)}', space=vmem, size = 0x9000, scoped, tag = 'internal scratch']
  #allocation2 [shape = 'f32[14,84]{1,0:T(8,128)}', space=vmem, size = 0x2000, scoped, tag = 'scratch operand']
  #allocation3 [shape = 'f32[5,80]{1,0:T(8,128)}', space=vmem, size = 0x1000, scoped, tag = 'scratch operand']
  %s0 = inlined_call_operand.vmem [shape: f32[2,32,32], index: 0, kind: input, shape index: {}]
  %s1 = inlined_call_operand.vmem [shape: f32[5,32,168], index: 1, kind: input, shape index: {}]
  %s2 = inlined_call_operand.vmem [shape: f32[1,168], index: 2, kind: input, shape index: {}]
  %s3 = inlined_call_operand.vmem [shape: f32[14,28], index: 3, kind: input, shape index: {}]
  %s4 = inlined_call_operand.vmem [shape: f32[168,84], index: 4, kind: input, shape index: {}]
  %s5 = inlined_call_operand.vmem [shape: f32[5,84,160], index: 5, kind: input, shape index: {}]
  %s6 = inlined_call_operand.vmem [shape: f32[1,160], index: 6, kind: input, shape index: {}]
  %s7 = inlined_call_operand.vmem [shape: f32[5,10], index: 7, kind: input, shape index: {}]
  %s8 = inlined_call_operand.vmem [shape: f32[160,80], index: 8, kind: input, shape index: {}]
  %s9 = inlined_call_operand.vmem [shape: f32[400,120], index: 9, kind: input, shape index: {}]
  %s10 = inlined_call_operand.vmem [shape: f32[1,120], index: 10, kind: input, shape index: {}]
  %s11 = inlined_call_operand.vmem [shape: f32[120,84], index: 11, kind: input, shape index: {}]
  %s12 = inlined_call_operand.vmem [shape: f32[1,84], index: 12, kind: input, shape index: {}]
  %s13 = inlined_call_operand.vmem [shape: f32[84,10], index: 13, kind: input, shape index: {}]
  %s14 = inlined_call_operand.vmem [shape: f32[1,10], index: 14, kind: input, shape index: {}]
  %s15 = inlined_call_operand.hbm [shape: f32[2,1,10], index: 15, kind: output, shape index: {}]
  %s16 = sld [smem:[#allocation0]]
  $region93: #{forward.1} parent=0
    _
  %s18 = ssub.s32 1, %s16
  %s19 = scalar_select 0, %s18, %s16
  $region1: #{forward.1} parent=0
    #allocation4 [shape = 'u8[1024]{0}', space=vmem, size = 0x400, scoped, tag = 'output window, operand 0']
    #allocation5 [shape = 's32[2]{0}', space=sflag, size = 0x8, scoped, tag = 'scoped memory for forward.1']
    %20 = vsyncpa [#allocation5], 0
    %s21 = scalar_lea.sflag [#allocation5], 1
    %22 = vsyncpa %s21, 0
    loop: start=0, step=1, limit=4
    $region2: #{forward.1} parent=1 // loop_pre_header
      _
    $region3: #{forward.1} parent=1 // loop_header
      %s24 = sphi 0, %s28
      %p25 = scmp.ge.s32.totalorder %s24, 4
      %s34 = sphi 0, %s36
      %s37 = sphi 0, %s34
      %s38 = sphi 0, %s37
      %s54 = sphi 0, %s38
      %s58 = sphi 0, %s58
      %s60 = sphi 0, %s58
      %s61 = sphi 0, %s60
      %s75 = sphi 0, %s61
      %s79 = sphi 0, %s79
      %s81 = sphi 0, %s79
      %s82 = sphi 0, %s81
      %s96 = sphi 0, %s82
      %s100 = sphi 0, %s100
      %s102 = sphi 0, %s100
      %s103 = sphi 0, %s102
      %s117 = sphi 0, %s103
      %s121 = sphi 0, %s121
      %s123 = sphi 0, %s121
      %s124 = sphi 0, %s123
      %s138 = sphi 0, %s124
      %s142 = sphi 0, %s142
      %s144 = sphi 0, %s142
      %s145 = sphi 0, %s144
      %s159 = sphi 0, %s145
      %s163 = sphi 0, %s163
      %s165 = sphi 0, %s163
      %s166 = sphi 0, %s165
      %s180 = sphi 0, %s166
      %s184 = sphi 0, %s184
      %s186 = sphi 0, %s184
      %s187 = sphi 0, %s186
      %s201 = sphi 0, %s187
      %s205 = sphi 0, %s205
      %s207 = sphi 0, %s205
      %s208 = sphi 0, %s207
      %s222 = sphi 0, %s208
      %s226 = sphi 0, %s226
      %s228 = sphi 0, %s226
      %s229 = sphi 0, %s228
      %s243 = sphi 0, %s229
      %s247 = sphi 0, %s247
      %s249 = sphi 0, %s247
      %s250 = sphi 0, %s249
      %s264 = sphi 0, %s250
      %s268 = sphi 0, %s268
      %s270 = sphi 0, %s268
      %s271 = sphi 0, %s270
      %s285 = sphi 0, %s271
      %s289 = sphi 0, %s289
      %s291 = sphi 0, %s289
      %s292 = sphi 0, %s291
      %s306 = sphi 0, %s292
      %s310 = sphi 0, %s310
      %s312 = sphi 0, %s310
      %s313 = sphi 0, %s312
      %s327 = sphi 0, %s313
      %s331 = sphi 0, %s331
      %s333 = sphi 0, %s331
      %s334 = sphi 0, %s333
      %s348 = sphi 0, %s334
      %s354 = sphi 0, %s356
      %s357 = sphi 0, %s354
      %s358 = sphi 0, %s357
      %s374 = sphi 0, %s358
    $region4: #{forward.1} parent=1 // loop_header_branch
      %27 = sbr.rel (%p25) target = $region8
    $region5: #{forward.1} parent=1 // loop_body
      %s29 = ssub.s32 %s24, 1
      %s30 = ssub.s32 %s24, 2
      %s31 = sadd.s32 %s24, 1
      %s32 = ssub.s32 %s24, %s31
      %p33 = scmp.eq.s32.totalorder %s32, 0
      %s35 = sadd.s32 %s34, 1
      %s36 = scalar_select %p33, %s34, %s35
      %p39 = pneg %p33
      %p40 = scmp.eq.s32.totalorder %s24, 1
      %p41 = por %p39, %p40
      %p42 = scmp.ne.s32.totalorder %s34, %s37
      %p43 = scmp.eq.s32.totalorder %s24, 0
      %p44 = por %p42, %p43
      %p45 = scmp.ne.s32.totalorder %s34, %s37
      %p46 = scmp.eq.s32.totalorder %s29, 1
      %p47 = por %p45, %p46
      %p48 = scmp.ne.s32.totalorder %s37, %s38
      %p49 = scmp.eq.s32.totalorder %s29, 0
      %p50 = por %p48, %p49
      %p51 = scmp.ne.s32.totalorder %s37, %s38
      %p52 = scmp.eq.s32.totalorder %s30, 1
      %p53 = por %p51, %p52
      %p55 = scmp.ne.s32.totalorder %s38, %s54
      %p56 = scmp.eq.s32.totalorder %s30, 0
      %p57 = por %p55, %p56
      %s59 = sadd.s32 %s58, 1
      %p62 = scmp.eq.s32.totalorder %s24, 1
      %p63 = scmp.ne.s32.totalorder %s58, %s60
      %p64 = scmp.eq.s32.totalorder %s24, 0
      %p65 = por %p63, %p64
      %p66 = scmp.ne.s32.totalorder %s58, %s60
      %p67 = scmp.eq.s32.totalorder %s29, 1
      %p68 = por %p66, %p67
      %p69 = scmp.ne.s32.totalorder %s60, %s61
      %p70 = scmp.eq.s32.totalorder %s29, 0
      %p71 = por %p69, %p70
      %p72 = scmp.ne.s32.totalorder %s60, %s61
      %p73 = scmp.eq.s32.totalorder %s30, 1
      %p74 = por %p72, %p73
      %p76 = scmp.ne.s32.totalorder %s61, %s75
      %p77 = scmp.eq.s32.totalorder %s30, 0
      %p78 = por %p76, %p77
      %s80 = sadd.s32 %s79, 1
      %p83 = scmp.eq.s32.totalorder %s24, 1
      %p84 = scmp.ne.s32.totalorder %s79, %s81
      %p85 = scmp.eq.s32.totalorder %s24, 0
      %p86 = por %p84, %p85
      %p87 = scmp.ne.s32.totalorder %s79, %s81
      %p88 = scmp.eq.s32.totalorder %s29, 1
      %p89 = por %p87, %p88
      %p90 = scmp.ne.s32.totalorder %s81, %s82
      %p91 = scmp.eq.s32.totalorder %s29, 0
      %p92 = por %p90, %p91
      %p93 = scmp.ne.s32.totalorder %s81, %s82
      %p94 = scmp.eq.s32.totalorder %s30, 1
      %p95 = por %p93, %p94
      %p97 = scmp.ne.s32.totalorder %s82, %s96
      %p98 = scmp.eq.s32.totalorder %s30, 0
      %p99 = por %p97, %p98
      %s101 = sadd.s32 %s100, 1
      %p104 = scmp.eq.s32.totalorder %s24, 1
      %p105 = scmp.ne.s32.totalorder %s100, %s102
      %p106 = scmp.eq.s32.totalorder %s24, 0
      %p107 = por %p105, %p106
      %p108 = scmp.ne.s32.totalorder %s100, %s102
      %p109 = scmp.eq.s32.totalorder %s29, 1
      %p110 = por %p108, %p109
      %p111 = scmp.ne.s32.totalorder %s102, %s103
      %p112 = scmp.eq.s32.totalorder %s29, 0
      %p113 = por %p111, %p112
      %p114 = scmp.ne.s32.totalorder %s102, %s103
      %p115 = scmp.eq.s32.totalorder %s30, 1
      %p116 = por %p114, %p115
      %p118 = scmp.ne.s32.totalorder %s103, %s117
      %p119 = scmp.eq.s32.totalorder %s30, 0
      %p120 = por %p118, %p119
      %s122 = sadd.s32 %s121, 1
      %p125 = scmp.eq.s32.totalorder %s24, 1
      %p126 = scmp.ne.s32.totalorder %s121, %s123
      %p127 = scmp.eq.s32.totalorder %s24, 0
      %p128 = por %p126, %p127
      %p129 = scmp.ne.s32.totalorder %s121, %s123
      %p130 = scmp.eq.s32.totalorder %s29, 1
      %p131 = por %p129, %p130
      %p132 = scmp.ne.s32.totalorder %s123, %s124
      %p133 = scmp.eq.s32.totalorder %s29, 0
      %p134 = por %p132, %p133
      %p135 = scmp.ne.s32.totalorder %s123, %s124
      %p136 = scmp.eq.s32.totalorder %s30, 1
      %p137 = por %p135, %p136
      %p139 = scmp.ne.s32.totalorder %s124, %s138
      %p140 = scmp.eq.s32.totalorder %s30, 0
      %p141 = por %p139, %p140
      %s143 = sadd.s32 %s142, 1
      %p146 = scmp.eq.s32.totalorder %s24, 1
      %p147 = scmp.ne.s32.totalorder %s142, %s144
      %p148 = scmp.eq.s32.totalorder %s24, 0
      %p149 = por %p147, %p148
      %p150 = scmp.ne.s32.totalorder %s142, %s144
      %p151 = scmp.eq.s32.totalorder %s29, 1
      %p152 = por %p150, %p151
      %p153 = scmp.ne.s32.totalorder %s144, %s145
      %p154 = scmp.eq.s32.totalorder %s29, 0
      %p155 = por %p153, %p154
      %p156 = scmp.ne.s32.totalorder %s144, %s145
      %p157 = scmp.eq.s32.totalorder %s30, 1
      %p158 = por %p156, %p157
      %p160 = scmp.ne.s32.totalorder %s145, %s159
      %p161 = scmp.eq.s32.totalorder %s30, 0
      %p162 = por %p160, %p161
      %s164 = sadd.s32 %s163, 1
      %p167 = scmp.eq.s32.totalorder %s24, 1
      %p168 = scmp.ne.s32.totalorder %s163, %s165
      %p169 = scmp.eq.s32.totalorder %s24, 0
      %p170 = por %p168, %p169
      %p171 = scmp.ne.s32.totalorder %s163, %s165
      %p172 = scmp.eq.s32.totalorder %s29, 1
      %p173 = por %p171, %p172
      %p174 = scmp.ne.s32.totalorder %s165, %s166
      %p175 = scmp.eq.s32.totalorder %s29, 0
      %p176 = por %p174, %p175
      %p177 = scmp.ne.s32.totalorder %s165, %s166
      %p178 = scmp.eq.s32.totalorder %s30, 1
      %p179 = por %p177, %p178
      %p181 = scmp.ne.s32.totalorder %s166, %s180
      %p182 = scmp.eq.s32.totalorder %s30, 0
      %p183 = por %p181, %p182
      %s185 = sadd.s32 %s184, 1
      %p188 = scmp.eq.s32.totalorder %s24, 1
      %p189 = scmp.ne.s32.totalorder %s184, %s186
      %p190 = scmp.eq.s32.totalorder %s24, 0
      %p191 = por %p189, %p190
      %p192 = scmp.ne.s32.totalorder %s184, %s186
      %p193 = scmp.eq.s32.totalorder %s29, 1
      %p194 = por %p192, %p193
      %p195 = scmp.ne.s32.totalorder %s186, %s187
      %p196 = scmp.eq.s32.totalorder %s29, 0
      %p197 = por %p195, %p196
      %p198 = scmp.ne.s32.totalorder %s186, %s187
      %p199 = scmp.eq.s32.totalorder %s30, 1
      %p200 = por %p198, %p199
      %p202 = scmp.ne.s32.totalorder %s187, %s201
      %p203 = scmp.eq.s32.totalorder %s30, 0
      %p204 = por %p202, %p203
      %s206 = sadd.s32 %s205, 1
      %p209 = scmp.eq.s32.totalorder %s24, 1
      %p210 = scmp.ne.s32.totalorder %s205, %s207
      %p211 = scmp.eq.s32.totalorder %s24, 0
      %p212 = por %p210, %p211
      %p213 = scmp.ne.s32.totalorder %s205, %s207
      %p214 = scmp.eq.s32.totalorder %s29, 1
      %p215 = por %p213, %p214
      %p216 = scmp.ne.s32.totalorder %s207, %s208
      %p217 = scmp.eq.s32.totalorder %s29, 0
      %p218 = por %p216, %p217
      %p219 = scmp.ne.s32.totalorder %s207, %s208
      %p220 = scmp.eq.s32.totalorder %s30, 1
      %p221 = por %p219, %p220
      %p223 = scmp.ne.s32.totalorder %s208, %s222
      %p224 = scmp.eq.s32.totalorder %s30, 0
      %p225 = por %p223, %p224
      %s227 = sadd.s32 %s226, 1
      %p230 = scmp.eq.s32.totalorder %s24, 1
      %p231 = scmp.ne.s32.totalorder %s226, %s228
      %p232 = scmp.eq.s32.totalorder %s24, 0
      %p233 = por %p231, %p232
      %p234 = scmp.ne.s32.totalorder %s226, %s228
      %p235 = scmp.eq.s32.totalorder %s29, 1
      %p236 = por %p234, %p235
      %p237 = scmp.ne.s32.totalorder %s228, %s229
      %p238 = scmp.eq.s32.totalorder %s29, 0
      %p239 = por %p237, %p238
      %p240 = scmp.ne.s32.totalorder %s228, %s229
      %p241 = scmp.eq.s32.totalorder %s30, 1
      %p242 = por %p240, %p241
      %p244 = scmp.ne.s32.totalorder %s229, %s243
      %p245 = scmp.eq.s32.totalorder %s30, 0
      %p246 = por %p244, %p245
      %s248 = sadd.s32 %s247, 1
      %p251 = scmp.eq.s32.totalorder %s24, 1
      %p252 = scmp.ne.s32.totalorder %s247, %s249
      %p253 = scmp.eq.s32.totalorder %s24, 0
      %p254 = por %p252, %p253
      %p255 = scmp.ne.s32.totalorder %s247, %s249
      %p256 = scmp.eq.s32.totalorder %s29, 1
      %p257 = por %p255, %p256
      %p258 = scmp.ne.s32.totalorder %s249, %s250
      %p259 = scmp.eq.s32.totalorder %s29, 0
      %p260 = por %p258, %p259
      %p261 = scmp.ne.s32.totalorder %s249, %s250
      %p262 = scmp.eq.s32.totalorder %s30, 1
      %p263 = por %p261, %p262
      %p265 = scmp.ne.s32.totalorder %s250, %s264
      %p266 = scmp.eq.s32.totalorder %s30, 0
      %p267 = por %p265, %p266
      %s269 = sadd.s32 %s268, 1
      %p272 = scmp.eq.s32.totalorder %s24, 1
      %p273 = scmp.ne.s32.totalorder %s268, %s270
      %p274 = scmp.eq.s32.totalorder %s24, 0
      %p275 = por %p273, %p274
      %p276 = scmp.ne.s32.totalorder %s268, %s270
      %p277 = scmp.eq.s32.totalorder %s29, 1
      %p278 = por %p276, %p277
      %p279 = scmp.ne.s32.totalorder %s270, %s271
      %p280 = scmp.eq.s32.totalorder %s29, 0
      %p281 = por %p279, %p280
      %p282 = scmp.ne.s32.totalorder %s270, %s271
      %p283 = scmp.eq.s32.totalorder %s30, 1
      %p284 = por %p282, %p283
      %p286 = scmp.ne.s32.totalorder %s271, %s285
      %p287 = scmp.eq.s32.totalorder %s30, 0
      %p288 = por %p286, %p287
      %s290 = sadd.s32 %s289, 1
      %p293 = scmp.eq.s32.totalorder %s24, 1
      %p294 = scmp.ne.s32.totalorder %s289, %s291
      %p295 = scmp.eq.s32.totalorder %s24, 0
      %p296 = por %p294, %p295
      %p297 = scmp.ne.s32.totalorder %s289, %s291
      %p298 = scmp.eq.s32.totalorder %s29, 1
      %p299 = por %p297, %p298
      %p300 = scmp.ne.s32.totalorder %s291, %s292
      %p301 = scmp.eq.s32.totalorder %s29, 0
      %p302 = por %p300, %p301
      %p303 = scmp.ne.s32.totalorder %s291, %s292
      %p304 = scmp.eq.s32.totalorder %s30, 1
      %p305 = por %p303, %p304
      %p307 = scmp.ne.s32.totalorder %s292, %s306
      %p308 = scmp.eq.s32.totalorder %s30, 0
      %p309 = por %p307, %p308
      %s311 = sadd.s32 %s310, 1
      %p314 = scmp.eq.s32.totalorder %s24, 1
      %p315 = scmp.ne.s32.totalorder %s310, %s312
      %p316 = scmp.eq.s32.totalorder %s24, 0
      %p317 = por %p315, %p316
      %p318 = scmp.ne.s32.totalorder %s310, %s312
      %p319 = scmp.eq.s32.totalorder %s29, 1
      %p320 = por %p318, %p319
      %p321 = scmp.ne.s32.totalorder %s312, %s313
      %p322 = scmp.eq.s32.totalorder %s29, 0
      %p323 = por %p321, %p322
      %p324 = scmp.ne.s32.totalorder %s312, %s313
      %p325 = scmp.eq.s32.totalorder %s30, 1
      %p326 = por %p324, %p325
      %p328 = scmp.ne.s32.totalorder %s313, %s327
      %p329 = scmp.eq.s32.totalorder %s30, 0
      %p330 = por %p328, %p329
      %s332 = sadd.s32 %s331, 1
      %p335 = scmp.eq.s32.totalorder %s24, 1
      %p336 = scmp.ne.s32.totalorder %s331, %s333
      %p337 = scmp.eq.s32.totalorder %s24, 0
      %p338 = por %p336, %p337
      %p339 = scmp.ne.s32.totalorder %s331, %s333
      %p340 = scmp.eq.s32.totalorder %s29, 1
      %p341 = por %p339, %p340
      %p342 = scmp.ne.s32.totalorder %s333, %s334
      %p343 = scmp.eq.s32.totalorder %s29, 0
      %p344 = por %p342, %p343
      %p345 = scmp.ne.s32.totalorder %s333, %s334
      %p346 = scmp.eq.s32.totalorder %s30, 1
      %p347 = por %p345, %p346
      %p349 = scmp.ne.s32.totalorder %s334, %s348
      %p350 = scmp.eq.s32.totalorder %s30, 0
      %p351 = por %p349, %p350
      %s352 = ssub.s32 %s24, %s31
      %p353 = scmp.eq.s32.totalorder %s352, 0
      %s355 = sadd.s32 %s354, 1
      %s356 = scalar_select %p353, %s354, %s355
      %p359 = pneg %p353
      %p360 = scmp.eq.s32.totalorder %s24, 1
      %p361 = por %p359, %p360
      %p362 = scmp.ne.s32.totalorder %s354, %s357
      %p363 = scmp.eq.s32.totalorder %s24, 0
      %p364 = por %p362, %p363
      %p365 = scmp.ne.s32.totalorder %s354, %s357
      %p366 = scmp.eq.s32.totalorder %s29, 1
      %p367 = por %p365, %p366
      %p368 = scmp.ne.s32.totalorder %s357, %s358
      %p369 = scmp.eq.s32.totalorder %s29, 0
      %p370 = por %p368, %p369
      %p371 = scmp.ne.s32.totalorder %s357, %s358
      %p372 = scmp.eq.s32.totalorder %s30, 1
      %p373 = por %p371, %p372
      %p375 = scmp.ne.s32.totalorder %s358, %s374
      %p376 = scmp.eq.s32.totalorder %s30, 0
      %p377 = por %p375, %p376
      %p378 = scmp.le.s32.totalorder 1, %s24
      %p379 = scmp.lt.s32.totalorder %s24, 3
      %p380 = pnand %p378, %p379
      %p381 = pneg %p380
      // Predicated region
      $region9: #{forward.1} parent=5 // pred_check
        _
      $region10: #{forward.1} parent=5 // pred_check_branch
        %383 = sbr.rel (%p380) target = $region12
      $region11: #{forward.1} parent=5 // pred_region
        %s384 = ssub.s32 %s24, 1
        // Predicated region
        $region13: #{forward.1} parent=11 // pred_check
          %p385 = pneg %p71
        $region14: #{forward.1} parent=11 // pred_check_branch
          %387 = sbr.rel (%p385) target = $region16
        $region15: #{forward.1} parent=11 // pred_region
          _
        $region16: #{forward.1} parent=11 // pred_fallthru
          _
        // Predicated region
        $region17: #{forward.1} parent=11 // pred_check
          %p388 = pneg %p92
        $region18: #{forward.1} parent=11 // pred_check_branch
          %390 = sbr.rel (%p388) target = $region20
        $region19: #{forward.1} parent=11 // pred_region
          _
        $region20: #{forward.1} parent=11 // pred_fallthru
          _
        // Predicated region
        $region21: #{forward.1} parent=11 // pred_check
          %p391 = pneg %p113
        $region22: #{forward.1} parent=11 // pred_check_branch
          %393 = sbr.rel (%p391) target = $region24
        $region23: #{forward.1} parent=11 // pred_region
          _
        $region24: #{forward.1} parent=11 // pred_fallthru
          _
        // Predicated region
        $region25: #{forward.1} parent=11 // pred_check
          %p394 = pneg %p134
        $region26: #{forward.1} parent=11 // pred_check_branch
          %396 = sbr.rel (%p394) target = $region28
        $region27: #{forward.1} parent=11 // pred_region
          _
        $region28: #{forward.1} parent=11 // pred_fallthru
          _
        // Predicated region
        $region29: #{forward.1} parent=11 // pred_check
          %p397 = pneg %p155
        $region30: #{forward.1} parent=11 // pred_check_branch
          %399 = sbr.rel (%p397) target = $region32
        $region31: #{forward.1} parent=11 // pred_region
          _
        $region32: #{forward.1} parent=11 // pred_fallthru
          _
        // Predicated region
        $region33: #{forward.1} parent=11 // pred_check
          %p400 = pneg %p176
        $region34: #{forward.1} parent=11 // pred_check_branch
          %402 = sbr.rel (%p400) target = $region36
        $region35: #{forward.1} parent=11 // pred_region
          _
        $region36: #{forward.1} parent=11 // pred_fallthru
          _
        // Predicated region
        $region37: #{forward.1} parent=11 // pred_check
          %p403 = pneg %p197
        $region38: #{forward.1} parent=11 // pred_check_branch
          %405 = sbr.rel (%p403) target = $region40
        $region39: #{forward.1} parent=11 // pred_region
          _
        $region40: #{forward.1} parent=11 // pred_fallthru
          _
        // Predicated region
        $region41: #{forward.1} parent=11 // pred_check
          %p406 = pneg %p218
        $region42: #{forward.1} parent=11 // pred_check_branch
          %408 = sbr.rel (%p406) target = $region44
        $region43: #{forward.1} parent=11 // pred_region
          _
        $region44: #{forward.1} parent=11 // pred_fallthru
          _
        // Predicated region
        $region45: #{forward.1} parent=11 // pred_check
          %p409 = pneg %p239
        $region46: #{forward.1} parent=11 // pred_check_branch
          %411 = sbr.rel (%p409) target = $region48
        $region47: #{forward.1} parent=11 // pred_region
          _
        $region48: #{forward.1} parent=11 // pred_fallthru
          _
        // Predicated region
        $region49: #{forward.1} parent=11 // pred_check
          %p412 = pneg %p260
        $region50: #{forward.1} parent=11 // pred_check_branch
          %414 = sbr.rel (%p412) target = $region52
        $region51: #{forward.1} parent=11 // pred_region
          _
        $region52: #{forward.1} parent=11 // pred_fallthru
          _
        // Predicated region
        $region53: #{forward.1} parent=11 // pred_check
          %p415 = pneg %p281
        $region54: #{forward.1} parent=11 // pred_check_branch
          %417 = sbr.rel (%p415) target = $region56
        $region55: #{forward.1} parent=11 // pred_region
          _
        $region56: #{forward.1} parent=11 // pred_fallthru
          _
        // Predicated region
        $region57: #{forward.1} parent=11 // pred_check
          %p418 = pneg %p302
        $region58: #{forward.1} parent=11 // pred_check_branch
          %420 = sbr.rel (%p418) target = $region60
        $region59: #{forward.1} parent=11 // pred_region
          _
        $region60: #{forward.1} parent=11 // pred_fallthru
          _
        // Predicated region
        $region61: #{forward.1} parent=11 // pred_check
          %p421 = pneg %p323
        $region62: #{forward.1} parent=11 // pred_check_branch
          %423 = sbr.rel (%p421) target = $region64
        $region63: #{forward.1} parent=11 // pred_region
          _
        $region64: #{forward.1} parent=11 // pred_fallthru
          _
        // Predicated region
        $region65: #{forward.1} parent=11 // pred_check
          %p424 = pneg %p344
        $region66: #{forward.1} parent=11 // pred_check_branch
          %426 = sbr.rel (%p424) target = $region68
        $region67: #{forward.1} parent=11 // pred_region
          _
        $region68: #{forward.1} parent=11 // pred_fallthru
          _
      $region12: #{forward.1} parent=5 // pred_fallthru
        _
      %p427 = scmp.lt.s32.totalorder %s24, 2
      // Predicated region
      $region69: #{forward.1} parent=5 // pred_check
        %p428 = pneg %p427
      $region70: #{forward.1} parent=5 // pred_check_branch
        %430 = sbr.rel (%p428) target = $region72
      $region71: #{forward.1} parent=5 // pred_region
        // Predicated region
        $region73: #{forward.1} parent=71 // pred_check
          %p431 = pneg %p44
        $region74: #{forward.1} parent=71 // pred_check_branch
          %433 = sbr.rel (%p431) target = $region76
        $region75: #{forward.1} parent=71 // pred_region
          %p434 = scmp.lt.s32.totalorder %s24, 1
          %s435 = scalar_select %p434, %s24, 1
          %s436 = smul.addr %s435, 4
          %s437 = smul.addr %s436, 8
          %s438 = scalar_lea.vmem %s0, %s437
        $region76: #{forward.1} parent=71 // pred_fallthru
          _
      $region72: #{forward.1} parent=5 // pred_fallthru
        _
      %p439 = scmp.le.s32.totalorder 1, %s24
      %p440 = scmp.lt.s32.totalorder %s24, 3
      %p441 = pnand %p439, %p440
      %p442 = pneg %p441
      // Predicated region
      $region77: #{forward.1} parent=5 // pred_check
        _
      $region78: #{forward.1} parent=5 // pred_check_branch
        %444 = sbr.rel (%p441) target = $region80
      $region79: #{forward.1} parent=5 // pred_region
        %s445 = ssub.s32 %s24, 1
        %p446 = scmp.lt.s32.totalorder %s29, 1
        %s447 = scalar_select %p446, %s29, 1
        %s448 = smul.addr %s447, 4
        %s449 = smul.addr %s448, 8
        %s450 = scalar_lea.vmem %s0, %s449
        %p451 = pneg %p50
        %p452 = pneg %p47
        %p453 = pneg %p71
        %p454 = pneg %p68
        %p455 = pneg %p92
        %p456 = pneg %p89
        %p457 = pneg %p113
        %p458 = pneg %p110
        %p459 = pneg %p134
        %p460 = pneg %p131
        %p461 = pneg %p155
        %p462 = pneg %p152
        %p463 = pneg %p176
        %p464 = pneg %p173
        %p465 = pneg %p197
        %p466 = pneg %p194
        %p467 = pneg %p218
        %p468 = pneg %p215
        %p469 = pneg %p239
        %p470 = pneg %p236
        %p471 = pneg %p260
        %p472 = pneg %p257
        %p473 = pneg %p281
        %p474 = pneg %p278
        %p475 = pneg %p302
        %p476 = pneg %p299
        %p477 = pneg %p323
        %p478 = pneg %p320
        %p479 = pneg %p344
        %p480 = pneg %p341
        %p481 = pneg %p370
        %p482 = pneg %p367
        %s483 = sand.u32 %s357, 1
        %s484 = scalar_lea.sflag [#allocation5], %s483
        %s485 = sand.u32 %s357, 1
        %s486 = scalar_lea.vmem [#allocation4], %s485
        %p487 = scmp.lt.s32.totalorder %s29, 1
        %s488 = scalar_select %p487, %s29, 1
        %s489 = smul.addr %s488, 4
        %s490 = smul.addr %s489, 8
        %s491 = scalar_lea.vmem %s0, %s490
        %v492 = vld [vmem:[%s491] sm:$0xff]
        %v493 = vld [vmem:[%s491 + $0x8] sm:$0xff]
        %v494 = vld [vmem:[%s491 + $0x10] sm:$0xff]
        %v495 = vld [vmem:[%s491 + $0x18] sm:$0xf]
        %v496 = vld [vmem:[%s1] sm:$0xff]
        %v497 = vld [vmem:[%s1 + $0x8] sm:$0xff]
        %v498 = vld [vmem:[%s1 + $0x10] sm:$0xff]
        %v499 = vld [vmem:[%s1 + $0x18] sm:$0xff]
        %v500 = vld [vmem:[%s1 + $0x20] sm:$0xff]
        %v501 = vld [vmem:[%s1 + $0x28] sm:$0xff]
        %v502 = vld [vmem:[%s1 + $0x30] sm:$0xff]
        %v503 = vld [vmem:[%s1 + $0x38] sm:$0xff]
        %v504 = vld [vmem:[%s491 + $0x1] sm:$0xff]
        %v505 = vld [vmem:[%s491 + $0x9] sm:$0xff]
        %v506 = vld [vmem:[%s491 + $0x11] sm:$0xff]
        %v507 = vld [vmem:[%s491 + $0x19] sm:$0xf]
        %s508 = scalar_lea.vmem %s1, 64
        %v509 = vld [vmem:[%s508] sm:$0xff]
        %v510 = vld [vmem:[%s508 + $0x8] sm:$0xff]
        %v511 = vld [vmem:[%s508 + $0x10] sm:$0xff]
        %v512 = vld [vmem:[%s508 + $0x18] sm:$0xff]
        %v513 = vld [vmem:[%s508 + $0x20] sm:$0xff]
        %v514 = vld [vmem:[%s508 + $0x28] sm:$0xff]
        %v515 = vld [vmem:[%s508 + $0x30] sm:$0xff]
        %v516 = vld [vmem:[%s508 + $0x38] sm:$0xff]
        %vm517 = vcmask 261120
        %v519 = vsel %vm517, %v504, 0
        %v522 = vsel %vm517, %v505, 0
        %v525 = vsel %vm517, %v506, 0
        %v528 = vsel %vm517, %v507, 0
        %530 = vmatpush.msra.mxu0 0.0
        %531 = vmatpush.msra.mxu0 0.0
        %532 = vmatpush.msra.mxu0 0.0
        %533 = vmatpush.msra.mxu0 0.0
        %534 = vmatpush.msra.mxu0 0.0
        %535 = vmatpush.msra.mxu0 0.0
        %536 = vmatpush.msra.mxu0 0.0
        %537 = vmatpush.msra.mxu0 0.0
        %538 = vmatpush.msra.mxu0 0.0
        %539 = vmatpush.msra.mxu0 0.0
        %540 = vmatpush.msra.mxu0 0.0
        %541 = vmatpush.msra.mxu0 0.0
        %542 = vmatpush.msra.mxu0 %v515
        %543 = vmatpush.msra.mxu0 %v513
        %544 = vmatpush.msra.mxu0 %v511
        %545 = vmatpush.msra.mxu0 %v509
        %546 = vmatmul.f32.gmra.mxu0 %v519
        %v547 = vpop.f32.mrf.mxu0
        %v548 = vadd.f32 0.0, %v547
        %549 = vmatmul.f32.gmra.mxu0 %v522
        %v550 = vpop.f32.mrf.mxu0
        %v551 = vadd.f32 0.0, %v550
        %552 = vmatmul.f32.gmra.mxu0 %v525
        %v553 = vpop.f32.mrf.mxu0
        %v554 = vadd.f32 0.0, %v553
        %555 = vmatmul.f32.gmra.mxu0 %v528
        %v556 = vpop.f32.mrf.mxu0
        %v557 = vadd.f32 0.0, %v556
        %558 = vdwg.mxu0
        %559 = vmatpush.msra.mxu0 0.0
        %560 = vmatpush.msra.mxu0 0.0
        %561 = vmatpush.msra.mxu0 0.0
        %562 = vmatpush.msra.mxu0 0.0
        %563 = vmatpush.msra.mxu0 0.0
        %564 = vmatpush.msra.mxu0 0.0
        %565 = vmatpush.msra.mxu0 0.0
        %566 = vmatpush.msra.mxu0 0.0
        %567 = vmatpush.msra.mxu0 0.0
        %568 = vmatpush.msra.mxu0 0.0
        %569 = vmatpush.msra.mxu0 0.0
        %570 = vmatpush.msra.mxu0 0.0
        %571 = vmatpush.msra.mxu0 %v516
        %572 = vmatpush.msra.mxu0 %v514
        %573 = vmatpush.msra.mxu0 %v512
        %574 = vmatpush.msra.mxu0 %v510
        %575 = vmatmul.f32.gmra.mxu0 %v519
        %v576 = vpop.f32.mrf.mxu0
        %v577 = vadd.f32 0.0, %v576
        %578 = vmatmul.f32.gmra.mxu0 %v522
        %v579 = vpop.f32.mrf.mxu0
        %v580 = vadd.f32 0.0, %v579
        %581 = vmatmul.f32.gmra.mxu0 %v525
        %v582 = vpop.f32.mrf.mxu0
        %v583 = vadd.f32 0.0, %v582
        %584 = vmatmul.f32.gmra.mxu0 %v528
        %v585 = vpop.f32.mrf.mxu0
        %v586 = vadd.f32 0.0, %v585
        %587 = vdwg.mxu0
        %v589 = vsel %vm517, %v492, 0
        %v592 = vsel %vm517, %v493, 0
        %v595 = vsel %vm517, %v494, 0
        %v598 = vsel %vm517, %v495, 0
        %600 = vmatpush.msra.mxu0 0.0
        %601 = vmatpush.msra.mxu0 0.0
        %602 = vmatpush.msra.mxu0 0.0
        %603 = vmatpush.msra.mxu0 0.0
        %604 = vmatpush.msra.mxu0 0.0
        %605 = vmatpush.msra.mxu0 0.0
        %606 = vmatpush.msra.mxu0 0.0
        %607 = vmatpush.msra.mxu0 0.0
        %608 = vmatpush.msra.mxu0 0.0
        %609 = vmatpush.msra.mxu0 0.0
        %610 = vmatpush.msra.mxu0 0.0
        %611 = vmatpush.msra.mxu0 0.0
        %612 = vmatpush.msra.mxu0 %v502
        %613 = vmatpush.msra.mxu0 %v500
        %614 = vmatpush.msra.mxu0 %v498
        %615 = vmatpush.msra.mxu0 %v496
        %616 = vmatmul.f32.gmra.mxu0 %v589
        %v617 = vpop.f32.mrf.mxu0
        %v618 = vadd.f32 %v548, %v617
        %619 = vmatmul.f32.gmra.mxu0 %v592
        %v620 = vpop.f32.mrf.mxu0
        %v621 = vadd.f32 %v551, %v620
        %622 = vmatmul.f32.gmra.mxu0 %v595
        %v623 = vpop.f32.mrf.mxu0
        %v624 = vadd.f32 %v554, %v623
        %625 = vmatmul.f32.gmra.mxu0 %v598
        %v626 = vpop.f32.mrf.mxu0
        %v627 = vadd.f32 %v557, %v626
        %628 = vdwg.mxu0
        %629 = vmatpush.msra.mxu0 0.0
        %630 = vmatpush.msra.mxu0 0.0
        %631 = vmatpush.msra.mxu0 0.0
        %632 = vmatpush.msra.mxu0 0.0
        %633 = vmatpush.msra.mxu0 0.0
        %634 = vmatpush.msra.mxu0 0.0
        %635 = vmatpush.msra.mxu0 0.0
        %636 = vmatpush.msra.mxu0 0.0
        %637 = vmatpush.msra.mxu0 0.0
        %638 = vmatpush.msra.mxu0 0.0
        %639 = vmatpush.msra.mxu0 0.0
        %640 = vmatpush.msra.mxu0 0.0
        %641 = vmatpush.msra.mxu0 %v503
        %642 = vmatpush.msra.mxu0 %v501
        %643 = vmatpush.msra.mxu0 %v499
        %644 = vmatpush.msra.mxu0 %v497
        %645 = vmatmul.f32.gmra.mxu0 %v589
        %v646 = vpop.f32.mrf.mxu0
        %v647 = vadd.f32 %v577, %v646
        %648 = vmatmul.f32.gmra.mxu0 %v592
        %v649 = vpop.f32.mrf.mxu0
        %v650 = vadd.f32 %v580, %v649
        %651 = vmatmul.f32.gmra.mxu0 %v595
        %v652 = vpop.f32.mrf.mxu0
        %v653 = vadd.f32 %v583, %v652
        %654 = vmatmul.f32.gmra.mxu0 %v598
        %v655 = vpop.f32.mrf.mxu0
        %v656 = vadd.f32 %v586, %v655
        %657 = vdwg.mxu0
        %v658 = vld [vmem:[%s491 + $0x2] sm:$0xff]
        %v659 = vld [vmem:[%s491 + $0xa] sm:$0xff]
        %v660 = vld [vmem:[%s491 + $0x12] sm:$0xff]
        %v661 = vld [vmem:[%s491 + $0x1a] sm:$0xf]
        %s662 = scalar_lea.vmem %s1, 128
        %v663 = vld [vmem:[%s662] sm:$0xff]
        %v664 = vld [vmem:[%s662 + $0x8] sm:$0xff]
        %v665 = vld [vmem:[%s662 + $0x10] sm:$0xff]
        %v666 = vld [vmem:[%s662 + $0x18] sm:$0xff]
        %v667 = vld [vmem:[%s662 + $0x20] sm:$0xff]
        %v668 = vld [vmem:[%s662 + $0x28] sm:$0xff]
        %v669 = vld [vmem:[%s662 + $0x30] sm:$0xff]
        %v670 = vld [vmem:[%s662 + $0x38] sm:$0xff]
        %v672 = vsel %vm517, %v658, 0
        %v675 = vsel %vm517, %v659, 0
        %v678 = vsel %vm517, %v660, 0
        %v681 = vsel %vm517, %v661, 0
        %683 = vmatpush.msra.mxu0 0.0
        %684 = vmatpush.msra.mxu0 0.0
        %685 = vmatpush.msra.mxu0 0.0
        %686 = vmatpush.msra.mxu0 0.0
        %687 = vmatpush.msra.mxu0 0.0
        %688 = vmatpush.msra.mxu0 0.0
        %689 = vmatpush.msra.mxu0 0.0
        %690 = vmatpush.msra.mxu0 0.0
        %691 = vmatpush.msra.mxu0 0.0
        %692 = vmatpush.msra.mxu0 0.0
        %693 = vmatpush.msra.mxu0 0.0
        %694 = vmatpush.msra.mxu0 0.0
        %695 = vmatpush.msra.mxu0 %v669
        %696 = vmatpush.msra.mxu0 %v667
        %697 = vmatpush.msra.mxu0 %v665
        %698 = vmatpush.msra.mxu0 %v663
        %699 = vmatmul.f32.gmra.mxu0 %v672
        %v700 = vpop.f32.mrf.mxu0
        %v701 = vadd.f32 0.0, %v700
        %702 = vmatmul.f32.gmra.mxu0 %v675
        %v703 = vpop.f32.mrf.mxu0
        %v704 = vadd.f32 0.0, %v703
        %705 = vmatmul.f32.gmra.mxu0 %v678
        %v706 = vpop.f32.mrf.mxu0
        %v707 = vadd.f32 0.0, %v706
        %708 = vmatmul.f32.gmra.mxu0 %v681
        %v709 = vpop.f32.mrf.mxu0
        %v710 = vadd.f32 0.0, %v709
        %711 = vdwg.mxu0
        %712 = vmatpush.msra.mxu0 0.0
        %713 = vmatpush.msra.mxu0 0.0
        %714 = vmatpush.msra.mxu0 0.0
        %715 = vmatpush.msra.mxu0 0.0
        %716 = vmatpush.msra.mxu0 0.0
        %717 = vmatpush.msra.mxu0 0.0
        %718 = vmatpush.msra.mxu0 0.0
        %719 = vmatpush.msra.mxu0 0.0
        %720 = vmatpush.msra.mxu0 0.0
        %721 = vmatpush.msra.mxu0 0.0
        %722 = vmatpush.msra.mxu0 0.0
        %723 = vmatpush.msra.mxu0 0.0
        %724 = vmatpush.msra.mxu0 %v670
        %725 = vmatpush.msra.mxu0 %v668
        %726 = vmatpush.msra.mxu0 %v666
        %727 = vmatpush.msra.mxu0 %v664
        %728 = vmatmul.f32.gmra.mxu0 %v672
        %v729 = vpop.f32.mrf.mxu0
        %v730 = vadd.f32 0.0, %v729
        %731 = vmatmul.f32.gmra.mxu0 %v675
        %v732 = vpop.f32.mrf.mxu0
        %v733 = vadd.f32 0.0, %v732
        %734 = vmatmul.f32.gmra.mxu0 %v678
        %v735 = vpop.f32.mrf.mxu0
        %v736 = vadd.f32 0.0, %v735
        %737 = vmatmul.f32.gmra.mxu0 %v681
        %v738 = vpop.f32.mrf.mxu0
        %v739 = vadd.f32 0.0, %v738
        %740 = vdwg.mxu0
        %v741 = vadd.f32 %v618, %v701
        %v742 = vadd.f32 %v647, %v730
        %v743 = vadd.f32 %v621, %v704
        %v744 = vadd.f32 %v650, %v733
        %v745 = vadd.f32 %v624, %v707
        %v746 = vadd.f32 %v653, %v736
        %v747 = vadd.f32 %v627, %v710
        %v748 = vadd.f32 %v656, %v739
        %v749 = vld [vmem:[%s491 + $0x3] sm:$0xff]
        %v750 = vld [vmem:[%s491 + $0xb] sm:$0xff]
        %v751 = vld [vmem:[%s491 + $0x13] sm:$0xff]
        %v752 = vld [vmem:[%s491 + $0x1b] sm:$0xf]
        %s753 = scalar_lea.vmem %s1, 192
        %v754 = vld [vmem:[%s753] sm:$0xff]
        %v755 = vld [vmem:[%s753 + $0x8] sm:$0xff]
        %v756 = vld [vmem:[%s753 + $0x10] sm:$0xff]
        %v757 = vld [vmem:[%s753 + $0x18] sm:$0xff]
        %v758 = vld [vmem:[%s753 + $0x20] sm:$0xff]
        %v759 = vld [vmem:[%s753 + $0x28] sm:$0xff]
        %v760 = vld [vmem:[%s753 + $0x30] sm:$0xff]
        %v761 = vld [vmem:[%s753 + $0x38] sm:$0xff]
        %v763 = vsel %vm517, %v749, 0
        %v766 = vsel %vm517, %v750, 0
        %v769 = vsel %vm517, %v751, 0
        %v772 = vsel %vm517, %v752, 0
        %774 = vmatpush.msra.mxu0 0.0
        %775 = vmatpush.msra.mxu0 0.0
        %776 = vmatpush.msra.mxu0 0.0
        %777 = vmatpush.msra.mxu0 0.0
        %778 = vmatpush.msra.mxu0 0.0
        %779 = vmatpush.msra.mxu0 0.0
        %780 = vmatpush.msra.mxu0 0.0
        %781 = vmatpush.msra.mxu0 0.0
        %782 = vmatpush.msra.mxu0 0.0
        %783 = vmatpush.msra.mxu0 0.0
        %784 = vmatpush.msra.mxu0 0.0
        %785 = vmatpush.msra.mxu0 0.0
        %786 = vmatpush.msra.mxu0 %v760
        %787 = vmatpush.msra.mxu0 %v758
        %788 = vmatpush.msra.mxu0 %v756
        %789 = vmatpush.msra.mxu0 %v754
        %790 = vmatmul.f32.gmra.mxu0 %v763
        %v791 = vpop.f32.mrf.mxu0
        %v792 = vadd.f32 0.0, %v791
        %793 = vmatmul.f32.gmra.mxu0 %v766
        %v794 = vpop.f32.mrf.mxu0
        %v795 = vadd.f32 0.0, %v794
        %796 = vmatmul.f32.gmra.mxu0 %v769
        %v797 = vpop.f32.mrf.mxu0
        %v798 = vadd.f32 0.0, %v797
        %799 = vmatmul.f32.gmra.mxu0 %v772
        %v800 = vpop.f32.mrf.mxu0
        %v801 = vadd.f32 0.0, %v800
        %802 = vdwg.mxu0
        %803 = vmatpush.msra.mxu0 0.0
        %804 = vmatpush.msra.mxu0 0.0
        %805 = vmatpush.msra.mxu0 0.0
        %806 = vmatpush.msra.mxu0 0.0
        %807 = vmatpush.msra.mxu0 0.0
        %808 = vmatpush.msra.mxu0 0.0
        %809 = vmatpush.msra.mxu0 0.0
        %810 = vmatpush.msra.mxu0 0.0
        %811 = vmatpush.msra.mxu0 0.0
        %812 = vmatpush.msra.mxu0 0.0
        %813 = vmatpush.msra.mxu0 0.0
        %814 = vmatpush.msra.mxu0 0.0
        %815 = vmatpush.msra.mxu0 %v761
        %816 = vmatpush.msra.mxu0 %v759
        %817 = vmatpush.msra.mxu0 %v757
        %818 = vmatpush.msra.mxu0 %v755
        %819 = vmatmul.f32.gmra.mxu0 %v763
        %v820 = vpop.f32.mrf.mxu0
        %v821 = vadd.f32 0.0, %v820
        %822 = vmatmul.f32.gmra.mxu0 %v766
        %v823 = vpop.f32.mrf.mxu0
        %v824 = vadd.f32 0.0, %v823
        %825 = vmatmul.f32.gmra.mxu0 %v769
        %v826 = vpop.f32.mrf.mxu0
        %v827 = vadd.f32 0.0, %v826
        %828 = vmatmul.f32.gmra.mxu0 %v772
        %v829 = vpop.f32.mrf.mxu0
        %v830 = vadd.f32 0.0, %v829
        %831 = vdwg.mxu0
        %v832 = vadd.f32 %v741, %v792
        %v833 = vadd.f32 %v742, %v821
        %v834 = vadd.f32 %v743, %v795
        %v835 = vadd.f32 %v744, %v824
        %v836 = vadd.f32 %v745, %v798
        %v837 = vadd.f32 %v746, %v827
        %v838 = vadd.f32 %v747, %v801
        %v839 = vadd.f32 %v748, %v830
        %v840 = vld [vmem:[%s491 + $0x4] sm:$0xff]
        %v841 = vld [vmem:[%s491 + $0xc] sm:$0xff]
        %v842 = vld [vmem:[%s491 + $0x14] sm:$0xff]
        %v843 = vld [vmem:[%s491 + $0x1c] sm:$0xf]
        %s844 = scalar_lea.vmem %s1, 256
        %v845 = vld [vmem:[%s844] sm:$0xff]
        %v846 = vld [vmem:[%s844 + $0x8] sm:$0xff]
        %v847 = vld [vmem:[%s844 + $0x10] sm:$0xff]
        %v848 = vld [vmem:[%s844 + $0x18] sm:$0xff]
        %v849 = vld [vmem:[%s844 + $0x20] sm:$0xff]
        %v850 = vld [vmem:[%s844 + $0x28] sm:$0xff]
        %v851 = vld [vmem:[%s844 + $0x30] sm:$0xff]
        %v852 = vld [vmem:[%s844 + $0x38] sm:$0xff]
        %v854 = vsel %vm517, %v840, 0
        %v857 = vsel %vm517, %v841, 0
        %v860 = vsel %vm517, %v842, 0
        %v863 = vsel %vm517, %v843, 0
        %865 = vmatpush.msra.mxu0 0.0
        %866 = vmatpush.msra.mxu0 0.0
        %867 = vmatpush.msra.mxu0 0.0
        %868 = vmatpush.msra.mxu0 0.0
        %869 = vmatpush.msra.mxu0 0.0
        %870 = vmatpush.msra.mxu0 0.0
        %871 = vmatpush.msra.mxu0 0.0
        %872 = vmatpush.msra.mxu0 0.0
        %873 = vmatpush.msra.mxu0 0.0
        %874 = vmatpush.msra.mxu0 0.0
        %875 = vmatpush.msra.mxu0 0.0
        %876 = vmatpush.msra.mxu0 0.0
        %877 = vmatpush.msra.mxu0 %v851
        %878 = vmatpush.msra.mxu0 %v849
        %879 = vmatpush.msra.mxu0 %v847
        %880 = vmatpush.msra.mxu0 %v845
        %881 = vmatmul.f32.gmra.mxu0 %v854
        %v882 = vpop.f32.mrf.mxu0
        %v883 = vadd.f32 0.0, %v882
        %884 = vmatmul.f32.gmra.mxu0 %v857
        %v885 = vpop.f32.mrf.mxu0
        %v886 = vadd.f32 0.0, %v885
        %887 = vmatmul.f32.gmra.mxu0 %v860
        %v888 = vpop.f32.mrf.mxu0
        %v889 = vadd.f32 0.0, %v888
        %890 = vmatmul.f32.gmra.mxu0 %v863
        %v891 = vpop.f32.mrf.mxu0
        %v892 = vadd.f32 0.0, %v891
        %893 = vdwg.mxu0
        %894 = vmatpush.msra.mxu0 0.0
        %895 = vmatpush.msra.mxu0 0.0
        %896 = vmatpush.msra.mxu0 0.0
        %897 = vmatpush.msra.mxu0 0.0
        %898 = vmatpush.msra.mxu0 0.0
        %899 = vmatpush.msra.mxu0 0.0
        %900 = vmatpush.msra.mxu0 0.0
        %901 = vmatpush.msra.mxu0 0.0
        %902 = vmatpush.msra.mxu0 0.0
        %903 = vmatpush.msra.mxu0 0.0
        %904 = vmatpush.msra.mxu0 0.0
        %905 = vmatpush.msra.mxu0 0.0
        %906 = vmatpush.msra.mxu0 %v852
        %907 = vmatpush.msra.mxu0 %v850
        %908 = vmatpush.msra.mxu0 %v848
        %909 = vmatpush.msra.mxu0 %v846
        %910 = vmatmul.f32.gmra.mxu0 %v854
        %v911 = vpop.f32.mrf.mxu0
        %v912 = vadd.f32 0.0, %v911
        %913 = vmatmul.f32.gmra.mxu0 %v857
        %v914 = vpop.f32.mrf.mxu0
        %v915 = vadd.f32 0.0, %v914
        %916 = vmatmul.f32.gmra.mxu0 %v860
        %v917 = vpop.f32.mrf.mxu0
        %v918 = vadd.f32 0.0, %v917
        %919 = vmatmul.f32.gmra.mxu0 %v863
        %v920 = vpop.f32.mrf.mxu0
        %v921 = vadd.f32 0.0, %v920
        %922 = vdwg.mxu0
        %v923 = vadd.f32 %v832, %v883
        %v924 = vadd.f32 %v833, %v912
        %v925 = vadd.f32 %v834, %v886
        %v926 = vadd.f32 %v835, %v915
        %v927 = vadd.f32 %v836, %v889
        %v928 = vadd.f32 %v837, %v918
        %v929 = vadd.f32 %v838, %v892
        %v930 = vadd.f32 %v839, %v921
        %v931 = vld [vmem:[%s2] sm:$0x3]
        %v933 = vperm.slane %v931, 0
        %v934 = vperm.slane %v931, 1
        %v937 = vadd.f32 %v923, %v933
        %v938 = vadd.f32 %v924, %v934
        %v939 = vadd.f32 %v925, %v933
        %v940 = vadd.f32 %v926, %v934
        %v941 = vadd.f32 %v927, %v933
        %v942 = vadd.f32 %v928, %v934
        %v943 = vadd.f32 %v929, %v933
        %v944 = vadd.f32 %v930, %v934
        %v945 = vsub.f32 0.0, %v937
        %v946 = vsub.f32 0.0, %v938
        %v947 = vsub.f32 0.0, %v939
        %v948 = vsub.f32 0.0, %v940
        %v949 = vsub.f32 0.0, %v941
        %v950 = vsub.f32 0.0, %v942
        %v951 = vsub.f32 0.0, %v943
        %v952 = vsub.f32 0.0, %v944
        %v953 = vmul.f32 %v945, 1.442695
        %v954 = vpow.pop %v953
        %v955 = vmul.f32 %v946, 1.442695
        %v956 = vpow.pop %v955
        %v957 = vmul.f32 %v947, 1.442695
        %v958 = vpow.pop %v957
        %v959 = vmul.f32 %v948, 1.442695
        %v960 = vpow.pop %v959
        %v961 = vmul.f32 %v949, 1.442695
        %v962 = vpow.pop %v961
        %v963 = vmul.f32 %v950, 1.442695
        %v964 = vpow.pop %v963
        %v965 = vmul.f32 %v951, 1.442695
        %v966 = vpow.pop %v965
        %v967 = vmul.f32 %v952, 1.442695
        %v968 = vpow.pop %v967
        %v969 = vadd.f32 %v954, 1.0
        %v970 = vadd.f32 %v956, 1.0
        %v971 = vadd.f32 %v958, 1.0
        %v972 = vadd.f32 %v960, 1.0
        %v973 = vadd.f32 %v962, 1.0
        %v974 = vadd.f32 %v964, 1.0
        %v975 = vadd.f32 %v966, 1.0
        %v976 = vadd.f32 %v968, 1.0
        %v977 = vrcp.pop %v969
        %v978 = vmul.f32 %v969, %v977
        %v979 = vsub.f32 1.0, %v978
        %v980 = vmul.f32 %v977, %v979
        %v981 = vadd.f32 %v977, %v980
        %vm982 = vweird.f32 %v969
        %vm983 = vweird.f32 %v977
        %vm984 = vmor %vm982, %vm983
        %v985 = vsel %vm984, %v977, %v981
        %v986 = vand.u32 2147483647, %v969
        %vm987 = vcmp.eq.f32.partialorder %v986, 8.507059e+37
        %v988 = vand.u32 %v969, 2147483648
        %v989 = vor.u32 1.1754944e-38, %v988
        %v990 = vsel %vm987, %v989, %v985
        %v991 = vmul.f32 1.0, %v990
        %v992 = vrcp.pop %v970
        %v993 = vmul.f32 %v970, %v992
        %v994 = vsub.f32 1.0, %v993
        %v995 = vmul.f32 %v992, %v994
        %v996 = vadd.f32 %v992, %v995
        %vm997 = vweird.f32 %v970
        %vm998 = vweird.f32 %v992
        %vm999 = vmor %vm997, %vm998
        %v1000 = vsel %vm999, %v992, %v996
        %v1001 = vand.u32 2147483647, %v970
        %vm1002 = vcmp.eq.f32.partialorder %v1001, 8.507059e+37
        %v1003 = vand.u32 %v970, 2147483648
        %v1004 = vor.u32 1.1754944e-38, %v1003
        %v1005 = vsel %vm1002, %v1004, %v1000
        %v1006 = vmul.f32 1.0, %v1005
        %v1007 = vrcp.pop %v971
        %v1008 = vmul.f32 %v971, %v1007
        %v1009 = vsub.f32 1.0, %v1008
        %v1010 = vmul.f32 %v1007, %v1009
        %v1011 = vadd.f32 %v1007, %v1010
        %vm1012 = vweird.f32 %v971
        %vm1013 = vweird.f32 %v1007
        %vm1014 = vmor %vm1012, %vm1013
        %v1015 = vsel %vm1014, %v1007, %v1011
        %v1016 = vand.u32 2147483647, %v971
        %vm1017 = vcmp.eq.f32.partialorder %v1016, 8.507059e+37
        %v1018 = vand.u32 %v971, 2147483648
        %v1019 = vor.u32 1.1754944e-38, %v1018
        %v1020 = vsel %vm1017, %v1019, %v1015
        %v1021 = vmul.f32 1.0, %v1020
        %v1022 = vrcp.pop %v972
        %v1023 = vmul.f32 %v972, %v1022
        %v1024 = vsub.f32 1.0, %v1023
        %v1025 = vmul.f32 %v1022, %v1024
        %v1026 = vadd.f32 %v1022, %v1025
        %vm1027 = vweird.f32 %v972
        %vm1028 = vweird.f32 %v1022
        %vm1029 = vmor %vm1027, %vm1028
        %v1030 = vsel %vm1029, %v1022, %v1026
        %v1031 = vand.u32 2147483647, %v972
        %vm1032 = vcmp.eq.f32.partialorder %v1031, 8.507059e+37
        %v1033 = vand.u32 %v972, 2147483648
        %v1034 = vor.u32 1.1754944e-38, %v1033
        %v1035 = vsel %vm1032, %v1034, %v1030
        %v1036 = vmul.f32 1.0, %v1035
        %v1037 = vrcp.pop %v973
        %v1038 = vmul.f32 %v973, %v1037
        %v1039 = vsub.f32 1.0, %v1038
        %v1040 = vmul.f32 %v1037, %v1039
        %v1041 = vadd.f32 %v1037, %v1040
        %vm1042 = vweird.f32 %v973
        %vm1043 = vweird.f32 %v1037
        %vm1044 = vmor %vm1042, %vm1043
        %v1045 = vsel %vm1044, %v1037, %v1041
        %v1046 = vand.u32 2147483647, %v973
        %vm1047 = vcmp.eq.f32.partialorder %v1046, 8.507059e+37
        %v1048 = vand.u32 %v973, 2147483648
        %v1049 = vor.u32 1.1754944e-38, %v1048
        %v1050 = vsel %vm1047, %v1049, %v1045
        %v1051 = vmul.f32 1.0, %v1050
        %v1052 = vrcp.pop %v974
        %v1053 = vmul.f32 %v974, %v1052
        %v1054 = vsub.f32 1.0, %v1053
        %v1055 = vmul.f32 %v1052, %v1054
        %v1056 = vadd.f32 %v1052, %v1055
        %vm1057 = vweird.f32 %v974
        %vm1058 = vweird.f32 %v1052
        %vm1059 = vmor %vm1057, %vm1058
        %v1060 = vsel %vm1059, %v1052, %v1056
        %v1061 = vand.u32 2147483647, %v974
        %vm1062 = vcmp.eq.f32.partialorder %v1061, 8.507059e+37
        %v1063 = vand.u32 %v974, 2147483648
        %v1064 = vor.u32 1.1754944e-38, %v1063
        %v1065 = vsel %vm1062, %v1064, %v1060
        %v1066 = vmul.f32 1.0, %v1065
        %v1067 = vrcp.pop %v975
        %v1068 = vmul.f32 %v975, %v1067
        %v1069 = vsub.f32 1.0, %v1068
        %v1070 = vmul.f32 %v1067, %v1069
        %v1071 = vadd.f32 %v1067, %v1070
        %vm1072 = vweird.f32 %v975
        %vm1073 = vweird.f32 %v1067
        %vm1074 = vmor %vm1072, %vm1073
        %v1075 = vsel %vm1074, %v1067, %v1071
        %v1076 = vand.u32 2147483647, %v975
        %vm1077 = vcmp.eq.f32.partialorder %v1076, 8.507059e+37
        %v1078 = vand.u32 %v975, 2147483648
        %v1079 = vor.u32 1.1754944e-38, %v1078
        %v1080 = vsel %vm1077, %v1079, %v1075
        %v1081 = vmul.f32 1.0, %v1080
        %v1082 = vrcp.pop %v976
        %v1083 = vmul.f32 %v976, %v1082
        %v1084 = vsub.f32 1.0, %v1083
        %v1085 = vmul.f32 %v1082, %v1084
        %v1086 = vadd.f32 %v1082, %v1085
        %vm1087 = vweird.f32 %v976
        %vm1088 = vweird.f32 %v1082
        %vm1089 = vmor %vm1087, %vm1088
        %v1090 = vsel %vm1089, %v1082, %v1086
        %v1091 = vand.u32 2147483647, %v976
        %vm1092 = vcmp.eq.f32.partialorder %v1091, 8.507059e+37
        %v1093 = vand.u32 %v976, 2147483648
        %v1094 = vor.u32 1.1754944e-38, %v1093
        %v1095 = vsel %vm1092, %v1094, %v1090
        %v1096 = vmul.f32 1.0, %v1095
        %v1097 = vld [vmem:[%s3] sm:$0xff]
        %v1098 = vld [vmem:[%s3 + $0x8] sm:$0x3f]
        %vm1099 = vcmask 228352
        %v1101 = vsel %vm1099, %v1097, 0
        %v1104 = vsel %vm1099, %v1098, 0
        %vm1106 = vcmask 1043456
        %v1108 = vsel %vm1106, %v1081, 0
        %v1111 = vsel %vm1106, %v1096, 0
        %1113 = vmatpush.msra.mxu0 0.0
        %1114 = vmatpush.msra.mxu0 0.0
        %1115 = vmatpush.msra.mxu0 0.0
        %1116 = vmatpush.msra.mxu0 0.0
        %1117 = vmatpush.msra.mxu0 0.0
        %1118 = vmatpush.msra.mxu0 0.0
        %1119 = vmatpush.msra.mxu0 0.0
        %1120 = vmatpush.msra.mxu0 0.0
        %1121 = vmatpush.msra.mxu0 0.0
        %1122 = vmatpush.msra.mxu0 0.0
        %1123 = vmatpush.msra.mxu0 0.0
        %1124 = vmatpush.msra.mxu0 0.0
        %1125 = vmatpush.msra.mxu0 %v1108
        %1126 = vmatpush.msra.mxu0 %v1051
        %1127 = vmatpush.msra.mxu0 %v1021
        %1128 = vmatpush.msra.mxu0 %v991
        %1129 = vmatmul.f32.gmra.mxu0 %v1101
        %v1130 = vpop.f32.mrf.mxu0
        %v1131 = vadd.f32 0.0, %v1130
        %1132 = vmatmul.f32.gmra.mxu0 %v1104
        %v1133 = vpop.f32.mrf.mxu0
        %v1134 = vadd.f32 0.0, %v1133
        %1135 = vdwg.mxu0
        %1136 = vmatpush.msra.mxu0 0.0
        %1137 = vmatpush.msra.mxu0 0.0
        %1138 = vmatpush.msra.mxu0 0.0
        %1139 = vmatpush.msra.mxu0 0.0
        %1140 = vmatpush.msra.mxu0 0.0
        %1141 = vmatpush.msra.mxu0 0.0
        %1142 = vmatpush.msra.mxu0 0.0
        %1143 = vmatpush.msra.mxu0 0.0
        %1144 = vmatpush.msra.mxu0 0.0
        %1145 = vmatpush.msra.mxu0 0.0
        %1146 = vmatpush.msra.mxu0 0.0
        %1147 = vmatpush.msra.mxu0 0.0
        %1148 = vmatpush.msra.mxu0 %v1111
        %1149 = vmatpush.msra.mxu0 %v1066
        %1150 = vmatpush.msra.mxu0 %v1036
        %1151 = vmatpush.msra.mxu0 %v1006
        %1152 = vmatmul.f32.gmra.mxu0 %v1101
        %v1153 = vpop.f32.mrf.mxu0
        %v1154 = vadd.f32 0.0, %v1153
        %1155 = vmatmul.f32.gmra.mxu0 %v1104
        %v1156 = vpop.f32.mrf.mxu0
        %v1157 = vadd.f32 0.0, %v1156
        %1158 = vdwg.mxu0
        %v1159 = vld [vmem:[%s4] sm:$0xff]
        %v1160 = vld [vmem:[%s4 + $0x8] sm:$0xff]
        %v1161 = vld [vmem:[%s4 + $0x10] sm:$0xff]
        %v1162 = vld [vmem:[%s4 + $0x18] sm:$0xff]
        %v1163 = vld [vmem:[%s4 + $0x20] sm:$0xff]
        %v1164 = vld [vmem:[%s4 + $0x28] sm:$0xff]
        %v1165 = vld [vmem:[%s4 + $0x30] sm:$0xff]
        %v1166 = vld [vmem:[%s4 + $0x38] sm:$0xff]
        %v1167 = vld [vmem:[%s4 + $0x40] sm:$0xff]
        %v1168 = vld [vmem:[%s4 + $0x48] sm:$0xff]
        %v1169 = vld [vmem:[%s4 + $0x50] sm:$0xff]
        %v1170 = vld [vmem:[%s4 + $0x58] sm:$0xff]
        %v1171 = vld [vmem:[%s4 + $0x60] sm:$0xff]
        %v1172 = vld [vmem:[%s4 + $0x68] sm:$0xff]
        %v1173 = vld [vmem:[%s4 + $0x70] sm:$0xff]
        %v1174 = vld [vmem:[%s4 + $0x78] sm:$0xff]
        %v1175 = vld [vmem:[%s4 + $0x80] sm:$0xff]
        %v1176 = vld [vmem:[%s4 + $0x88] sm:$0xff]
        %v1177 = vld [vmem:[%s4 + $0x90] sm:$0xff]
        %v1178 = vld [vmem:[%s4 + $0x98] sm:$0xff]
        %v1179 = vld [vmem:[%s4 + $0xa0] sm:$0xff]
        %vm1180 = vcmask 326656
        %v1182 = vsel %vm1180, %v1154, 0
        %v1185 = vsel %vm1180, %v1157, 0
        %1187 = vmatpush.msra.mxu0 %v1174
        %1188 = vmatpush.msra.mxu0 %v1173
        %1189 = vmatpush.msra.mxu0 %v1172
        %1190 = vmatpush.msra.mxu0 %v1171
        %1191 = vmatpush.msra.mxu0 %v1170
        %1192 = vmatpush.msra.mxu0 %v1169
        %1193 = vmatpush.msra.mxu0 %v1168
        %1194 = vmatpush.msra.mxu0 %v1167
        %1195 = vmatpush.msra.mxu0 %v1166
        %1196 = vmatpush.msra.mxu0 %v1165
        %1197 = vmatpush.msra.mxu0 %v1164
        %1198 = vmatpush.msra.mxu0 %v1163
        %1199 = vmatpush.msra.mxu0 %v1162
        %1200 = vmatpush.msra.mxu0 %v1161
        %1201 = vmatpush.msra.mxu0 %v1160
        %1202 = vmatpush.msra.mxu0 %v1159
        %1203 = vmatmul.f32.gmra.mxu0 %v1131
        %v1204 = vpop.f32.mrf.mxu0
        %v1205 = vadd.f32 0.0, %v1204
        %1206 = vmatmul.f32.gmra.mxu0 %v1134
        %v1207 = vpop.f32.mrf.mxu0
        %v1208 = vadd.f32 0.0, %v1207
        %1209 = vdwg.mxu0
        %1210 = vmatpush.msra.mxu0 0.0
        %1211 = vmatpush.msra.mxu0 0.0
        %1212 = vmatpush.msra.mxu0 0.0
        %1213 = vmatpush.msra.mxu0 0.0
        %1214 = vmatpush.msra.mxu0 0.0
        %1215 = vmatpush.msra.mxu0 0.0
        %1216 = vmatpush.msra.mxu0 0.0
        %1217 = vmatpush.msra.mxu0 0.0
        %1218 = vmatpush.msra.mxu0 0.0
        %1219 = vmatpush.msra.mxu0 0.0
        %1220 = vmatpush.msra.mxu0 0.0
        %1221 = vmatpush.msra.mxu0 %v1179
        %1222 = vmatpush.msra.mxu0 %v1178
        %1223 = vmatpush.msra.mxu0 %v1177
        %1224 = vmatpush.msra.mxu0 %v1176
        %1225 = vmatpush.msra.mxu0 %v1175
        %1226 = vmatmul.f32.gmra.mxu0 %v1182
        %v1227 = vpop.f32.mrf.mxu0
        %v1228 = vadd.f32 %v1205, %v1227
        %1229 = vmatmul.f32.gmra.mxu0 %v1185
        %v1230 = vpop.f32.mrf.mxu0
        %v1231 = vadd.f32 %v1208, %v1230
        %1232 = vdwg.mxu0
        %vm1233 = vcmask 687104
        %1234 = vst.msk [vmem:[#allocation2] sm:$0xff] %vm1233, %v1228
        %vm1235 = vcmask 685056
        %1236 = vst.msk [vmem:[#allocation2 + $0x8] sm:$0x3f] %vm1235, %v1231
        %v1237 = vld [vmem:[#allocation2] sm:$0xff]
        %v1238 = vld [vmem:[#allocation2 + $0x8] sm:$0x3]
        %v1239 = vld [vmem:[%s5] sm:$0xff]
        %v1240 = vld [vmem:[%s5 + $0x8] sm:$0xff]
        %v1241 = vld [vmem:[%s5 + $0x10] sm:$0xff]
        %v1242 = vld [vmem:[%s5 + $0x18] sm:$0xff]
        %v1243 = vld [vmem:[%s5 + $0x20] sm:$0xff]
        %v1244 = vld [vmem:[%s5 + $0x28] sm:$0xff]
        %v1245 = vld [vmem:[%s5 + $0x30] sm:$0xff]
        %v1246 = vld [vmem:[%s5 + $0x38] sm:$0xff]
        %v1247 = vld [vmem:[%s5 + $0x40] sm:$0xff]
        %v1248 = vld [vmem:[%s5 + $0x48] sm:$0xff]
        %v1249 = vld [vmem:[%s5 + $0x50] sm:$0xff]
        %v1250 = vld [vmem:[%s5 + $0x58] sm:$0xff]
        %v1251 = vld [vmem:[%s5 + $0x60] sm:$0xff]
        %v1252 = vld [vmem:[%s5 + $0x68] sm:$0xff]
        %v1253 = vld [vmem:[%s5 + $0x70] sm:$0xff]
        %v1254 = vld [vmem:[%s5 + $0x78] sm:$0xff]
        %v1255 = vld [vmem:[%s5 + $0x80] sm:$0xff]
        %v1256 = vld [vmem:[%s5 + $0x88] sm:$0xff]
        %v1257 = vld [vmem:[%s5 + $0x90] sm:$0xff]
        %v1258 = vld [vmem:[%s5 + $0x98] sm:$0xff]
        %v1259 = vld [vmem:[%s5 + $0xa0] sm:$0xf]
        %v1260 = vld [vmem:[%s5 + $0xa8] sm:$0xf]
        %v1261 = vld [vmem:[#allocation2 + $0x1] sm:$0xff]
        %v1262 = vld [vmem:[#allocation2 + $0x9] sm:$0x3]
        %s1263 = scalar_lea.vmem %s5, 176
        %v1264 = vld [vmem:[%s1263] sm:$0xff]
        %v1265 = vld [vmem:[%s1263 + $0x8] sm:$0xff]
        %v1266 = vld [vmem:[%s1263 + $0x10] sm:$0xff]
        %v1267 = vld [vmem:[%s1263 + $0x18] sm:$0xff]
        %v1268 = vld [vmem:[%s1263 + $0x20] sm:$0xff]
        %v1269 = vld [vmem:[%s1263 + $0x28] sm:$0xff]
        %v1270 = vld [vmem:[%s1263 + $0x30] sm:$0xff]
        %v1271 = vld [vmem:[%s1263 + $0x38] sm:$0xff]
        %v1272 = vld [vmem:[%s1263 + $0x40] sm:$0xff]
        %v1273 = vld [vmem:[%s1263 + $0x48] sm:$0xff]
        %v1274 = vld [vmem:[%s1263 + $0x50] sm:$0xff]
        %v1275 = vld [vmem:[%s1263 + $0x58] sm:$0xff]
        %v1276 = vld [vmem:[%s1263 + $0x60] sm:$0xff]
        %v1277 = vld [vmem:[%s1263 + $0x68] sm:$0xff]
        %v1278 = vld [vmem:[%s1263 + $0x70] sm:$0xff]
        %v1279 = vld [vmem:[%s1263 + $0x78] sm:$0xff]
        %v1280 = vld [vmem:[%s1263 + $0x80] sm:$0xff]
        %v1281 = vld [vmem:[%s1263 + $0x88] sm:$0xff]
        %v1282 = vld [vmem:[%s1263 + $0x90] sm:$0xff]
        %v1283 = vld [vmem:[%s1263 + $0x98] sm:$0xff]
        %v1284 = vld [vmem:[%s1263 + $0xa0] sm:$0xf]
        %v1285 = vld [vmem:[%s1263 + $0xa8] sm:$0xf]
        %v1287 = vsel %vm1233, %v1261, 0
        %v1290 = vsel %vm1233, %v1262, 0
        %v1293 = vsel %vm1106, %v1284, 0
        %v1296 = vsel %vm1106, %v1285, 0
        %1298 = vmatpush.msra.mxu0 0.0
        %1299 = vmatpush.msra.mxu0 0.0
        %1300 = vmatpush.msra.mxu0 0.0
        %1301 = vmatpush.msra.mxu0 0.0
        %1302 = vmatpush.msra.mxu0 0.0
        %1303 = vmatpush.msra.mxu0 %v1293
        %1304 = vmatpush.msra.mxu0 %v1282
        %1305 = vmatpush.msra.mxu0 %v1280
        %1306 = vmatpush.msra.mxu0 %v1278
        %1307 = vmatpush.msra.mxu0 %v1276
        %1308 = vmatpush.msra.mxu0 %v1274
        %1309 = vmatpush.msra.mxu0 %v1272
        %1310 = vmatpush.msra.mxu0 %v1270
        %1311 = vmatpush.msra.mxu0 %v1268
        %1312 = vmatpush.msra.mxu0 %v1266
        %1313 = vmatpush.msra.mxu0 %v1264
        %1314 = vmatmul.f32.gmra.mxu0 %v1287
        %v1315 = vpop.f32.mrf.mxu0
        %v1316 = vadd.f32 0.0, %v1315
        %1317 = vmatmul.f32.gmra.mxu0 %v1290
        %v1318 = vpop.f32.mrf.mxu0
        %v1319 = vadd.f32 0.0, %v1318
        %1320 = vdwg.mxu0
        %1321 = vmatpush.msra.mxu0 0.0
        %1322 = vmatpush.msra.mxu0 0.0
        %1323 = vmatpush.msra.mxu0 0.0
        %1324 = vmatpush.msra.mxu0 0.0
        %1325 = vmatpush.msra.mxu0 0.0
        %1326 = vmatpush.msra.mxu0 %v1296
        %1327 = vmatpush.msra.mxu0 %v1283
        %1328 = vmatpush.msra.mxu0 %v1281
        %1329 = vmatpush.msra.mxu0 %v1279
        %1330 = vmatpush.msra.mxu0 %v1277
        %1331 = vmatpush.msra.mxu0 %v1275
        %1332 = vmatpush.msra.mxu0 %v1273
        %1333 = vmatpush.msra.mxu0 %v1271
        %1334 = vmatpush.msra.mxu0 %v1269
        %1335 = vmatpush.msra.mxu0 %v1267
        %1336 = vmatpush.msra.mxu0 %v1265
        %1337 = vmatmul.f32.gmra.mxu0 %v1287
        %v1338 = vpop.f32.mrf.mxu0
        %v1339 = vadd.f32 0.0, %v1338
        %1340 = vmatmul.f32.gmra.mxu0 %v1290
        %v1341 = vpop.f32.mrf.mxu0
        %v1342 = vadd.f32 0.0, %v1341
        %1343 = vdwg.mxu0
        %v1345 = vsel %vm1233, %v1237, 0
        %v1348 = vsel %vm1233, %v1238, 0
        %v1351 = vsel %vm1106, %v1259, 0
        %v1354 = vsel %vm1106, %v1260, 0
        %1356 = vmatpush.msra.mxu0 0.0
        %1357 = vmatpush.msra.mxu0 0.0
        %1358 = vmatpush.msra.mxu0 0.0
        %1359 = vmatpush.msra.mxu0 0.0
        %1360 = vmatpush.msra.mxu0 0.0
        %1361 = vmatpush.msra.mxu0 %v1351
        %1362 = vmatpush.msra.mxu0 %v1257
        %1363 = vmatpush.msra.mxu0 %v1255
        %1364 = vmatpush.msra.mxu0 %v1253
        %1365 = vmatpush.msra.mxu0 %v1251
        %1366 = vmatpush.msra.mxu0 %v1249
        %1367 = vmatpush.msra.mxu0 %v1247
        %1368 = vmatpush.msra.mxu0 %v1245
        %1369 = vmatpush.msra.mxu0 %v1243
        %1370 = vmatpush.msra.mxu0 %v1241
        %1371 = vmatpush.msra.mxu0 %v1239
        %1372 = vmatmul.f32.gmra.mxu0 %v1345
        %v1373 = vpop.f32.mrf.mxu0
        %v1374 = vadd.f32 %v1316, %v1373
        %1375 = vmatmul.f32.gmra.mxu0 %v1348
        %v1376 = vpop.f32.mrf.mxu0
        %v1377 = vadd.f32 %v1319, %v1376
        %1378 = vdwg.mxu0
        %1379 = vmatpush.msra.mxu0 0.0
        %1380 = vmatpush.msra.mxu0 0.0
        %1381 = vmatpush.msra.mxu0 0.0
        %1382 = vmatpush.msra.mxu0 0.0
        %1383 = vmatpush.msra.mxu0 0.0
        %1384 = vmatpush.msra.mxu0 %v1354
        %1385 = vmatpush.msra.mxu0 %v1258
        %1386 = vmatpush.msra.mxu0 %v1256
        %1387 = vmatpush.msra.mxu0 %v1254
        %1388 = vmatpush.msra.mxu0 %v1252
        %1389 = vmatpush.msra.mxu0 %v1250
        %1390 = vmatpush.msra.mxu0 %v1248
        %1391 = vmatpush.msra.mxu0 %v1246
        %1392 = vmatpush.msra.mxu0 %v1244
        %1393 = vmatpush.msra.mxu0 %v1242
        %1394 = vmatpush.msra.mxu0 %v1240
        %1395 = vmatmul.f32.gmra.mxu0 %v1345
        %v1396 = vpop.f32.mrf.mxu0
        %v1397 = vadd.f32 %v1339, %v1396
        %1398 = vmatmul.f32.gmra.mxu0 %v1348
        %v1399 = vpop.f32.mrf.mxu0
        %v1400 = vadd.f32 %v1342, %v1399
        %1401 = vdwg.mxu0
        %v1402 = vld [vmem:[#allocation2 + $0x2] sm:$0xff]
        %v1403 = vld [vmem:[#allocation2 + $0xa] sm:$0x3]
        %s1404 = scalar_lea.vmem %s5, 352
        %v1405 = vld [vmem:[%s1404] sm:$0xff]
        %v1406 = vld [vmem:[%s1404 + $0x8] sm:$0xff]
        %v1407 = vld [vmem:[%s1404 + $0x10] sm:$0xff]
        %v1408 = vld [vmem:[%s1404 + $0x18] sm:$0xff]
        %v1409 = vld [vmem:[%s1404 + $0x20] sm:$0xff]
        %v1410 = vld [vmem:[%s1404 + $0x28] sm:$0xff]
        %v1411 = vld [vmem:[%s1404 + $0x30] sm:$0xff]
        %v1412 = vld [vmem:[%s1404 + $0x38] sm:$0xff]
        %v1413 = vld [vmem:[%s1404 + $0x40] sm:$0xff]
        %v1414 = vld [vmem:[%s1404 + $0x48] sm:$0xff]
        %v1415 = vld [vmem:[%s1404 + $0x50] sm:$0xff]
        %v1416 = vld [vmem:[%s1404 + $0x58] sm:$0xff]
        %v1417 = vld [vmem:[%s1404 + $0x60] sm:$0xff]
        %v1418 = vld [vmem:[%s1404 + $0x68] sm:$0xff]
        %v1419 = vld [vmem:[%s1404 + $0x70] sm:$0xff]
        %v1420 = vld [vmem:[%s1404 + $0x78] sm:$0xff]
        %v1421 = vld [vmem:[%s1404 + $0x80] sm:$0xff]
        %v1422 = vld [vmem:[%s1404 + $0x88] sm:$0xff]
        %v1423 = vld [vmem:[%s1404 + $0x90] sm:$0xff]
        %v1424 = vld [vmem:[%s1404 + $0x98] sm:$0xff]
        %v1425 = vld [vmem:[%s1404 + $0xa0] sm:$0xf]
        %v1426 = vld [vmem:[%s1404 + $0xa8] sm:$0xf]
        %v1428 = vsel %vm1233, %v1402, 0
        %v1431 = vsel %vm1233, %v1403, 0
        %v1434 = vsel %vm1106, %v1425, 0
        %v1437 = vsel %vm1106, %v1426, 0
        %1439 = vmatpush.msra.mxu0 0.0
        %1440 = vmatpush.msra.mxu0 0.0
        %1441 = vmatpush.msra.mxu0 0.0
        %1442 = vmatpush.msra.mxu0 0.0
        %1443 = vmatpush.msra.mxu0 0.0
        %1444 = vmatpush.msra.mxu0 %v1434
        %1445 = vmatpush.msra.mxu0 %v1423
        %1446 = vmatpush.msra.mxu0 %v1421
        %1447 = vmatpush.msra.mxu0 %v1419
        %1448 = vmatpush.msra.mxu0 %v1417
        %1449 = vmatpush.msra.mxu0 %v1415
        %1450 = vmatpush.msra.mxu0 %v1413
        %1451 = vmatpush.msra.mxu0 %v1411
        %1452 = vmatpush.msra.mxu0 %v1409
        %1453 = vmatpush.msra.mxu0 %v1407
        %1454 = vmatpush.msra.mxu0 %v1405
        %1455 = vmatmul.f32.gmra.mxu0 %v1428
        %v1456 = vpop.f32.mrf.mxu0
        %v1457 = vadd.f32 0.0, %v1456
        %1458 = vmatmul.f32.gmra.mxu0 %v1431
        %v1459 = vpop.f32.mrf.mxu0
        %v1460 = vadd.f32 0.0, %v1459
        %1461 = vdwg.mxu0
        %1462 = vmatpush.msra.mxu0 0.0
        %1463 = vmatpush.msra.mxu0 0.0
        %1464 = vmatpush.msra.mxu0 0.0
        %1465 = vmatpush.msra.mxu0 0.0
        %1466 = vmatpush.msra.mxu0 0.0
        %1467 = vmatpush.msra.mxu0 %v1437
        %1468 = vmatpush.msra.mxu0 %v1424
        %1469 = vmatpush.msra.mxu0 %v1422
        %1470 = vmatpush.msra.mxu0 %v1420
        %1471 = vmatpush.msra.mxu0 %v1418
        %1472 = vmatpush.msra.mxu0 %v1416
        %1473 = vmatpush.msra.mxu0 %v1414
        %1474 = vmatpush.msra.mxu0 %v1412
        %1475 = vmatpush.msra.mxu0 %v1410
        %1476 = vmatpush.msra.mxu0 %v1408
        %1477 = vmatpush.msra.mxu0 %v1406
        %1478 = vmatmul.f32.gmra.mxu0 %v1428
        %v1479 = vpop.f32.mrf.mxu0
        %v1480 = vadd.f32 0.0, %v1479
        %1481 = vmatmul.f32.gmra.mxu0 %v1431
        %v1482 = vpop.f32.mrf.mxu0
        %v1483 = vadd.f32 0.0, %v1482
        %1484 = vdwg.mxu0
        %v1485 = vadd.f32 %v1374, %v1457
        %v1486 = vadd.f32 %v1397, %v1480
        %v1487 = vadd.f32 %v1377, %v1460
        %v1488 = vadd.f32 %v1400, %v1483
        %v1489 = vld [vmem:[#allocation2 + $0x3] sm:$0xff]
        %v1490 = vld [vmem:[#allocation2 + $0xb] sm:$0x3]
        %s1491 = scalar_lea.vmem %s5, 528
        %v1492 = vld [vmem:[%s1491] sm:$0xff]
        %v1493 = vld [vmem:[%s1491 + $0x8] sm:$0xff]
        %v1494 = vld [vmem:[%s1491 + $0x10] sm:$0xff]
        %v1495 = vld [vmem:[%s1491 + $0x18] sm:$0xff]
        %v1496 = vld [vmem:[%s1491 + $0x20] sm:$0xff]
        %v1497 = vld [vmem:[%s1491 + $0x28] sm:$0xff]
        %v1498 = vld [vmem:[%s1491 + $0x30] sm:$0xff]
        %v1499 = vld [vmem:[%s1491 + $0x38] sm:$0xff]
        %v1500 = vld [vmem:[%s1491 + $0x40] sm:$0xff]
        %v1501 = vld [vmem:[%s1491 + $0x48] sm:$0xff]
        %v1502 = vld [vmem:[%s1491 + $0x50] sm:$0xff]
        %v1503 = vld [vmem:[%s1491 + $0x58] sm:$0xff]
        %v1504 = vld [vmem:[%s1491 + $0x60] sm:$0xff]
        %v1505 = vld [vmem:[%s1491 + $0x68] sm:$0xff]
        %v1506 = vld [vmem:[%s1491 + $0x70] sm:$0xff]
        %v1507 = vld [vmem:[%s1491 + $0x78] sm:$0xff]
        %v1508 = vld [vmem:[%s1491 + $0x80] sm:$0xff]
        %v1509 = vld [vmem:[%s1491 + $0x88] sm:$0xff]
        %v1510 = vld [vmem:[%s1491 + $0x90] sm:$0xff]
        %v1511 = vld [vmem:[%s1491 + $0x98] sm:$0xff]
        %v1512 = vld [vmem:[%s1491 + $0xa0] sm:$0xf]
        %v1513 = vld [vmem:[%s1491 + $0xa8] sm:$0xf]
        %v1515 = vsel %vm1233, %v1489, 0
        %v1518 = vsel %vm1233, %v1490, 0
        %v1521 = vsel %vm1106, %v1512, 0
        %v1524 = vsel %vm1106, %v1513, 0
        %1526 = vmatpush.msra.mxu0 0.0
        %1527 = vmatpush.msra.mxu0 0.0
        %1528 = vmatpush.msra.mxu0 0.0
        %1529 = vmatpush.msra.mxu0 0.0
        %1530 = vmatpush.msra.mxu0 0.0
        %1531 = vmatpush.msra.mxu0 %v1521
        %1532 = vmatpush.msra.mxu0 %v1510
        %1533 = vmatpush.msra.mxu0 %v1508
        %1534 = vmatpush.msra.mxu0 %v1506
        %1535 = vmatpush.msra.mxu0 %v1504
        %1536 = vmatpush.msra.mxu0 %v1502
        %1537 = vmatpush.msra.mxu0 %v1500
        %1538 = vmatpush.msra.mxu0 %v1498
        %1539 = vmatpush.msra.mxu0 %v1496
        %1540 = vmatpush.msra.mxu0 %v1494
        %1541 = vmatpush.msra.mxu0 %v1492
        %1542 = vmatmul.f32.gmra.mxu0 %v1515
        %v1543 = vpop.f32.mrf.mxu0
        %v1544 = vadd.f32 0.0, %v1543
        %1545 = vmatmul.f32.gmra.mxu0 %v1518
        %v1546 = vpop.f32.mrf.mxu0
        %v1547 = vadd.f32 0.0, %v1546
        %1548 = vdwg.mxu0
        %1549 = vmatpush.msra.mxu0 0.0
        %1550 = vmatpush.msra.mxu0 0.0
        %1551 = vmatpush.msra.mxu0 0.0
        %1552 = vmatpush.msra.mxu0 0.0
        %1553 = vmatpush.msra.mxu0 0.0
        %1554 = vmatpush.msra.mxu0 %v1524
        %1555 = vmatpush.msra.mxu0 %v1511
        %1556 = vmatpush.msra.mxu0 %v1509
        %1557 = vmatpush.msra.mxu0 %v1507
        %1558 = vmatpush.msra.mxu0 %v1505
        %1559 = vmatpush.msra.mxu0 %v1503
        %1560 = vmatpush.msra.mxu0 %v1501
        %1561 = vmatpush.msra.mxu0 %v1499
        %1562 = vmatpush.msra.mxu0 %v1497
        %1563 = vmatpush.msra.mxu0 %v1495
        %1564 = vmatpush.msra.mxu0 %v1493
        %1565 = vmatmul.f32.gmra.mxu0 %v1515
        %v1566 = vpop.f32.mrf.mxu0
        %v1567 = vadd.f32 0.0, %v1566
        %1568 = vmatmul.f32.gmra.mxu0 %v1518
        %v1569 = vpop.f32.mrf.mxu0
        %v1570 = vadd.f32 0.0, %v1569
        %1571 = vdwg.mxu0
        %v1572 = vadd.f32 %v1485, %v1544
        %v1573 = vadd.f32 %v1486, %v1567
        %v1574 = vadd.f32 %v1487, %v1547
        %v1575 = vadd.f32 %v1488, %v1570
        %v1576 = vld [vmem:[#allocation2 + $0x4] sm:$0xff]
        %v1577 = vld [vmem:[#allocation2 + $0xc] sm:$0x3]
        %s1578 = scalar_lea.vmem %s5, 704
        %v1579 = vld [vmem:[%s1578] sm:$0xff]
        %v1580 = vld [vmem:[%s1578 + $0x8] sm:$0xff]
        %v1581 = vld [vmem:[%s1578 + $0x10] sm:$0xff]
        %v1582 = vld [vmem:[%s1578 + $0x18] sm:$0xff]
        %v1583 = vld [vmem:[%s1578 + $0x20] sm:$0xff]
        %v1584 = vld [vmem:[%s1578 + $0x28] sm:$0xff]
        %v1585 = vld [vmem:[%s1578 + $0x30] sm:$0xff]
        %v1586 = vld [vmem:[%s1578 + $0x38] sm:$0xff]
        %v1587 = vld [vmem:[%s1578 + $0x40] sm:$0xff]
        %v1588 = vld [vmem:[%s1578 + $0x48] sm:$0xff]
        %v1589 = vld [vmem:[%s1578 + $0x50] sm:$0xff]
        %v1590 = vld [vmem:[%s1578 + $0x58] sm:$0xff]
        %v1591 = vld [vmem:[%s1578 + $0x60] sm:$0xff]
        %v1592 = vld [vmem:[%s1578 + $0x68] sm:$0xff]
        %v1593 = vld [vmem:[%s1578 + $0x70] sm:$0xff]
        %v1594 = vld [vmem:[%s1578 + $0x78] sm:$0xff]
        %v1595 = vld [vmem:[%s1578 + $0x80] sm:$0xff]
        %v1596 = vld [vmem:[%s1578 + $0x88] sm:$0xff]
        %v1597 = vld [vmem:[%s1578 + $0x90] sm:$0xff]
        %v1598 = vld [vmem:[%s1578 + $0x98] sm:$0xff]
        %v1599 = vld [vmem:[%s1578 + $0xa0] sm:$0xf]
        %v1600 = vld [vmem:[%s1578 + $0xa8] sm:$0xf]
        %v1602 = vsel %vm1233, %v1576, 0
        %v1605 = vsel %vm1233, %v1577, 0
        %v1608 = vsel %vm1106, %v1599, 0
        %v1611 = vsel %vm1106, %v1600, 0
        %1613 = vmatpush.msra.mxu0 0.0
        %1614 = vmatpush.msra.mxu0 0.0
        %1615 = vmatpush.msra.mxu0 0.0
        %1616 = vmatpush.msra.mxu0 0.0
        %1617 = vmatpush.msra.mxu0 0.0
        %1618 = vmatpush.msra.mxu0 %v1608
        %1619 = vmatpush.msra.mxu0 %v1597
        %1620 = vmatpush.msra.mxu0 %v1595
        %1621 = vmatpush.msra.mxu0 %v1593
        %1622 = vmatpush.msra.mxu0 %v1591
        %1623 = vmatpush.msra.mxu0 %v1589
        %1624 = vmatpush.msra.mxu0 %v1587
        %1625 = vmatpush.msra.mxu0 %v1585
        %1626 = vmatpush.msra.mxu0 %v1583
        %1627 = vmatpush.msra.mxu0 %v1581
        %1628 = vmatpush.msra.mxu0 %v1579
        %1629 = vmatmul.f32.gmra.mxu0 %v1602
        %v1630 = vpop.f32.mrf.mxu0
        %v1631 = vadd.f32 0.0, %v1630
        %1632 = vmatmul.f32.gmra.mxu0 %v1605
        %v1633 = vpop.f32.mrf.mxu0
        %v1634 = vadd.f32 0.0, %v1633
        %1635 = vdwg.mxu0
        %1636 = vmatpush.msra.mxu0 0.0
        %1637 = vmatpush.msra.mxu0 0.0
        %1638 = vmatpush.msra.mxu0 0.0
        %1639 = vmatpush.msra.mxu0 0.0
        %1640 = vmatpush.msra.mxu0 0.0
        %1641 = vmatpush.msra.mxu0 %v1611
        %1642 = vmatpush.msra.mxu0 %v1598
        %1643 = vmatpush.msra.mxu0 %v1596
        %1644 = vmatpush.msra.mxu0 %v1594
        %1645 = vmatpush.msra.mxu0 %v1592
        %1646 = vmatpush.msra.mxu0 %v1590
        %1647 = vmatpush.msra.mxu0 %v1588
        %1648 = vmatpush.msra.mxu0 %v1586
        %1649 = vmatpush.msra.mxu0 %v1584
        %1650 = vmatpush.msra.mxu0 %v1582
        %1651 = vmatpush.msra.mxu0 %v1580
        %1652 = vmatmul.f32.gmra.mxu0 %v1602
        %v1653 = vpop.f32.mrf.mxu0
        %v1654 = vadd.f32 0.0, %v1653
        %1655 = vmatmul.f32.gmra.mxu0 %v1605
        %v1656 = vpop.f32.mrf.mxu0
        %v1657 = vadd.f32 0.0, %v1656
        %1658 = vdwg.mxu0
        %v1659 = vadd.f32 %v1572, %v1631
        %v1660 = vadd.f32 %v1573, %v1654
        %v1661 = vadd.f32 %v1574, %v1634
        %v1662 = vadd.f32 %v1575, %v1657
        %v1663 = vld [vmem:[%s6] sm:$0x3]
        %v1665 = vperm.slane %v1663, 0
        %v1666 = vperm.slane %v1663, 1
        %v1669 = vadd.f32 %v1659, %v1665
        %v1670 = vadd.f32 %v1660, %v1666
        %v1671 = vadd.f32 %v1661, %v1665
        %v1672 = vadd.f32 %v1662, %v1666
        %v1673 = vsub.f32 0.0, %v1669
        %v1674 = vsub.f32 0.0, %v1670
        %v1675 = vsub.f32 0.0, %v1671
        %v1676 = vsub.f32 0.0, %v1672
        %v1677 = vmul.f32 %v1673, 1.442695
        %v1678 = vpow.pop %v1677
        %v1679 = vmul.f32 %v1674, 1.442695
        %v1680 = vpow.pop %v1679
        %v1681 = vmul.f32 %v1675, 1.442695
        %v1682 = vpow.pop %v1681
        %v1683 = vmul.f32 %v1676, 1.442695
        %v1684 = vpow.pop %v1683
        %v1685 = vadd.f32 %v1678, 1.0
        %v1686 = vadd.f32 %v1680, 1.0
        %v1687 = vadd.f32 %v1682, 1.0
        %v1688 = vadd.f32 %v1684, 1.0
        %v1689 = vrcp.pop %v1685
        %v1690 = vmul.f32 %v1685, %v1689
        %v1691 = vsub.f32 1.0, %v1690
        %v1692 = vmul.f32 %v1689, %v1691
        %v1693 = vadd.f32 %v1689, %v1692
        %vm1694 = vweird.f32 %v1685
        %vm1695 = vweird.f32 %v1689
        %vm1696 = vmor %vm1694, %vm1695
        %v1697 = vsel %vm1696, %v1689, %v1693
        %v1698 = vand.u32 2147483647, %v1685
        %vm1699 = vcmp.eq.f32.partialorder %v1698, 8.507059e+37
        %v1700 = vand.u32 %v1685, 2147483648
        %v1701 = vor.u32 1.1754944e-38, %v1700
        %v1702 = vsel %vm1699, %v1701, %v1697
        %v1703 = vmul.f32 1.0, %v1702
        %v1704 = vrcp.pop %v1686
        %v1705 = vmul.f32 %v1686, %v1704
        %v1706 = vsub.f32 1.0, %v1705
        %v1707 = vmul.f32 %v1704, %v1706
        %v1708 = vadd.f32 %v1704, %v1707
        %vm1709 = vweird.f32 %v1686
        %vm1710 = vweird.f32 %v1704
        %vm1711 = vmor %vm1709, %vm1710
        %v1712 = vsel %vm1711, %v1704, %v1708
        %v1713 = vand.u32 2147483647, %v1686
        %vm1714 = vcmp.eq.f32.partialorder %v1713, 8.507059e+37
        %v1715 = vand.u32 %v1686, 2147483648
        %v1716 = vor.u32 1.1754944e-38, %v1715
        %v1717 = vsel %vm1714, %v1716, %v1712
        %v1718 = vmul.f32 1.0, %v1717
        %v1719 = vrcp.pop %v1687
        %v1720 = vmul.f32 %v1687, %v1719
        %v1721 = vsub.f32 1.0, %v1720
        %v1722 = vmul.f32 %v1719, %v1721
        %v1723 = vadd.f32 %v1719, %v1722
        %vm1724 = vweird.f32 %v1687
        %vm1725 = vweird.f32 %v1719
        %vm1726 = vmor %vm1724, %vm1725
        %v1727 = vsel %vm1726, %v1719, %v1723
        %v1728 = vand.u32 2147483647, %v1687
        %vm1729 = vcmp.eq.f32.partialorder %v1728, 8.507059e+37
        %v1730 = vand.u32 %v1687, 2147483648
        %v1731 = vor.u32 1.1754944e-38, %v1730
        %v1732 = vsel %vm1729, %v1731, %v1727
        %v1733 = vmul.f32 1.0, %v1732
        %v1734 = vrcp.pop %v1688
        %v1735 = vmul.f32 %v1688, %v1734
        %v1736 = vsub.f32 1.0, %v1735
        %v1737 = vmul.f32 %v1734, %v1736
        %v1738 = vadd.f32 %v1734, %v1737
        %vm1739 = vweird.f32 %v1688
        %vm1740 = vweird.f32 %v1734
        %vm1741 = vmor %vm1739, %vm1740
        %v1742 = vsel %vm1741, %v1734, %v1738
        %v1743 = vand.u32 2147483647, %v1688
        %vm1744 = vcmp.eq.f32.partialorder %v1743, 8.507059e+37
        %v1745 = vand.u32 %v1688, 2147483648
        %v1746 = vor.u32 1.1754944e-38, %v1745
        %v1747 = vsel %vm1744, %v1746, %v1742
        %v1748 = vmul.f32 1.0, %v1747
        %v1749 = vld [vmem:[%s7] sm:$0x1f]
        %vm1750 = vcmask 80896
        %v1752 = vsel %vm1750, %v1749, 0
        %vm1754 = vcmask 1041408
        %v1756 = vsel %vm1754, %v1733, 0
        %v1759 = vsel %vm1754, %v1748, 0
        %1761 = vmatpush.msra.mxu0 0.0
        %1762 = vmatpush.msra.mxu0 0.0
        %1763 = vmatpush.msra.mxu0 0.0
        %1764 = vmatpush.msra.mxu0 0.0
        %1765 = vmatpush.msra.mxu0 0.0
        %1766 = vmatpush.msra.mxu0 0.0
        %1767 = vmatpush.msra.mxu0 0.0
        %1768 = vmatpush.msra.mxu0 0.0
        %1769 = vmatpush.msra.mxu0 0.0
        %1770 = vmatpush.msra.mxu0 0.0
        %1771 = vmatpush.msra.mxu0 0.0
        %1772 = vmatpush.msra.mxu0 0.0
        %1773 = vmatpush.msra.mxu0 0.0
        %1774 = vmatpush.msra.mxu0 0.0
        %1775 = vmatpush.msra.mxu0 %v1756
        %1776 = vmatpush.msra.mxu0 %v1703
        %1777 = vmatmul.f32.gmra.mxu0 %v1752
        %v1778 = vpop.f32.mrf.mxu0
        %v1779 = vadd.f32 0.0, %v1778
        %1780 = vdwg.mxu0
        %1781 = vmatpush.msra.mxu0 0.0
        %1782 = vmatpush.msra.mxu0 0.0
        %1783 = vmatpush.msra.mxu0 0.0
        %1784 = vmatpush.msra.mxu0 0.0
        %1785 = vmatpush.msra.mxu0 0.0
        %1786 = vmatpush.msra.mxu0 0.0
        %1787 = vmatpush.msra.mxu0 0.0
        %1788 = vmatpush.msra.mxu0 0.0
        %1789 = vmatpush.msra.mxu0 0.0
        %1790 = vmatpush.msra.mxu0 0.0
        %1791 = vmatpush.msra.mxu0 0.0
        %1792 = vmatpush.msra.mxu0 0.0
        %1793 = vmatpush.msra.mxu0 0.0
        %1794 = vmatpush.msra.mxu0 0.0
        %1795 = vmatpush.msra.mxu0 %v1759
        %1796 = vmatpush.msra.mxu0 %v1718
        %1797 = vmatmul.f32.gmra.mxu0 %v1752
        %v1798 = vpop.f32.mrf.mxu0
        %v1799 = vadd.f32 0.0, %v1798
        %1800 = vdwg.mxu0
        %v1801 = vld [vmem:[%s8] sm:$0xff]
        %v1802 = vld [vmem:[%s8 + $0x8] sm:$0xff]
        %v1803 = vld [vmem:[%s8 + $0x10] sm:$0xff]
        %v1804 = vld [vmem:[%s8 + $0x18] sm:$0xff]
        %v1805 = vld [vmem:[%s8 + $0x20] sm:$0xff]
        %v1806 = vld [vmem:[%s8 + $0x28] sm:$0xff]
        %v1807 = vld [vmem:[%s8 + $0x30] sm:$0xff]
        %v1808 = vld [vmem:[%s8 + $0x38] sm:$0xff]
        %v1809 = vld [vmem:[%s8 + $0x40] sm:$0xff]
        %v1810 = vld [vmem:[%s8 + $0x48] sm:$0xff]
        %v1811 = vld [vmem:[%s8 + $0x50] sm:$0xff]
        %v1812 = vld [vmem:[%s8 + $0x58] sm:$0xff]
        %v1813 = vld [vmem:[%s8 + $0x60] sm:$0xff]
        %v1814 = vld [vmem:[%s8 + $0x68] sm:$0xff]
        %v1815 = vld [vmem:[%s8 + $0x70] sm:$0xff]
        %v1816 = vld [vmem:[%s8 + $0x78] sm:$0xff]
        %v1817 = vld [vmem:[%s8 + $0x80] sm:$0xff]
        %v1818 = vld [vmem:[%s8 + $0x88] sm:$0xff]
        %v1819 = vld [vmem:[%s8 + $0x90] sm:$0xff]
        %v1820 = vld [vmem:[%s8 + $0x98] sm:$0xff]
        %v1822 = vsel %vm517, %v1799, 0
        %1824 = vmatpush.msra.mxu0 %v1816
        %1825 = vmatpush.msra.mxu0 %v1815
        %1826 = vmatpush.msra.mxu0 %v1814
        %1827 = vmatpush.msra.mxu0 %v1813
        %1828 = vmatpush.msra.mxu0 %v1812
        %1829 = vmatpush.msra.mxu0 %v1811
        %1830 = vmatpush.msra.mxu0 %v1810
        %1831 = vmatpush.msra.mxu0 %v1809
        %1832 = vmatpush.msra.mxu0 %v1808
        %1833 = vmatpush.msra.mxu0 %v1807
        %1834 = vmatpush.msra.mxu0 %v1806
        %1835 = vmatpush.msra.mxu0 %v1805
        %1836 = vmatpush.msra.mxu0 %v1804
        %1837 = vmatpush.msra.mxu0 %v1803
        %1838 = vmatpush.msra.mxu0 %v1802
        %1839 = vmatpush.msra.mxu0 %v1801
        %1840 = vmatmul.f32.gmra.mxu0 %v1779
        %v1841 = vpop.f32.mrf.mxu0
        %v1842 = vadd.f32 0.0, %v1841
        %1843 = vdwg.mxu0
        %1844 = vmatpush.msra.mxu0 0.0
        %1845 = vmatpush.msra.mxu0 0.0
        %1846 = vmatpush.msra.mxu0 0.0
        %1847 = vmatpush.msra.mxu0 0.0
        %1848 = vmatpush.msra.mxu0 0.0
        %1849 = vmatpush.msra.mxu0 0.0
        %1850 = vmatpush.msra.mxu0 0.0
        %1851 = vmatpush.msra.mxu0 0.0
        %1852 = vmatpush.msra.mxu0 0.0
        %1853 = vmatpush.msra.mxu0 0.0
        %1854 = vmatpush.msra.mxu0 0.0
        %1855 = vmatpush.msra.mxu0 0.0
        %1856 = vmatpush.msra.mxu0 %v1820
        %1857 = vmatpush.msra.mxu0 %v1819
        %1858 = vmatpush.msra.mxu0 %v1818
        %1859 = vmatpush.msra.mxu0 %v1817
        %1860 = vmatmul.f32.gmra.mxu0 %v1822
        %v1861 = vpop.f32.mrf.mxu0
        %v1862 = vadd.f32 %v1842, %v1861
        %1863 = vdwg.mxu0
        %vm1864 = vcmask 651264
        %1865 = vst.msk [vmem:[#allocation3] sm:$0x1f] %vm1864, %v1862
        %v1866 = vld [vmem:[%s10] sm:$0x1]
        %v1867 = vld [vmem:[#allocation3] sm:$0x1]
        %v1868 = vld [vmem:[%s9] sm:$0xff]
        %v1869 = vld [vmem:[%s9 + $0x8] sm:$0xff]
        %v1870 = vld [vmem:[%s9 + $0x10] sm:$0xff]
        %v1871 = vld [vmem:[%s9 + $0x18] sm:$0xff]
        %v1872 = vld [vmem:[%s9 + $0x20] sm:$0xff]
        %v1873 = vld [vmem:[%s9 + $0x28] sm:$0xff]
        %v1874 = vld [vmem:[%s9 + $0x30] sm:$0xff]
        %v1875 = vld [vmem:[%s9 + $0x38] sm:$0xff]
        %v1876 = vld [vmem:[%s9 + $0x40] sm:$0xff]
        %v1877 = vld [vmem:[%s9 + $0x48] sm:$0xff]
        %vm1878 = vcmask 654336
        %v1880 = vsel %vm1878, %v1867, 0
        %1882 = vmatpush.msra.mxu0 0.0
        %1883 = vmatpush.msra.mxu0 0.0
        %1884 = vmatpush.msra.mxu0 0.0
        %1885 = vmatpush.msra.mxu0 0.0
        %1886 = vmatpush.msra.mxu0 0.0
        %1887 = vmatpush.msra.mxu0 0.0
        %1888 = vmatpush.msra.mxu0 %v1877
        %1889 = vmatpush.msra.mxu0 %v1876
        %1890 = vmatpush.msra.mxu0 %v1875
        %1891 = vmatpush.msra.mxu0 %v1874
        %1892 = vmatpush.msra.mxu0 %v1873
        %1893 = vmatpush.msra.mxu0 %v1872
        %1894 = vmatpush.msra.mxu0 %v1871
        %1895 = vmatpush.msra.mxu0 %v1870
        %1896 = vmatpush.msra.mxu0 %v1869
        %1897 = vmatpush.msra.mxu0 %v1868
        %1898 = vmatmul.f32.gmra.mxu0 %v1880
        %v1899 = vpop.f32.mrf.mxu0
        %v1900 = vadd.f32 0.0, %v1899
        %1901 = vdwg.mxu0
        %v1902 = vadd.f32 %v1866, %v1900
        %v1903 = vld [vmem:[#allocation3 + $0x1] sm:$0x1]
        %v1904 = vld [vmem:[%s9 + $0x50] sm:$0xff]
        %v1905 = vld [vmem:[%s9 + $0x58] sm:$0xff]
        %v1906 = vld [vmem:[%s9 + $0x60] sm:$0xff]
        %v1907 = vld [vmem:[%s9 + $0x68] sm:$0xff]
        %v1908 = vld [vmem:[%s9 + $0x70] sm:$0xff]
        %v1909 = vld [vmem:[%s9 + $0x78] sm:$0xff]
        %v1910 = vld [vmem:[%s9 + $0x80] sm:$0xff]
        %v1911 = vld [vmem:[%s9 + $0x88] sm:$0xff]
        %v1912 = vld [vmem:[%s9 + $0x90] sm:$0xff]
        %v1913 = vld [vmem:[%s9 + $0x98] sm:$0xff]
        %v1915 = vsel %vm1878, %v1903, 0
        %1917 = vmatpush.msra.mxu0 0.0
        %1918 = vmatpush.msra.mxu0 0.0
        %1919 = vmatpush.msra.mxu0 0.0
        %1920 = vmatpush.msra.mxu0 0.0
        %1921 = vmatpush.msra.mxu0 0.0
        %1922 = vmatpush.msra.mxu0 0.0
        %1923 = vmatpush.msra.mxu0 %v1913
        %1924 = vmatpush.msra.mxu0 %v1912
        %1925 = vmatpush.msra.mxu0 %v1911
        %1926 = vmatpush.msra.mxu0 %v1910
        %1927 = vmatpush.msra.mxu0 %v1909
        %1928 = vmatpush.msra.mxu0 %v1908
        %1929 = vmatpush.msra.mxu0 %v1907
        %1930 = vmatpush.msra.mxu0 %v1906
        %1931 = vmatpush.msra.mxu0 %v1905
        %1932 = vmatpush.msra.mxu0 %v1904
        %1933 = vmatmul.f32.gmra.mxu0 %v1915
        %v1934 = vpop.f32.mrf.mxu0
        %v1935 = vadd.f32 0.0, %v1934
        %1936 = vdwg.mxu0
        %v1937 = vadd.f32 %v1902, %v1935
        %v1938 = vld [vmem:[#allocation3 + $0x2] sm:$0x1]
        %v1939 = vld [vmem:[%s9 + $0xa0] sm:$0xff]
        %v1940 = vld [vmem:[%s9 + $0xa8] sm:$0xff]
        %v1941 = vld [vmem:[%s9 + $0xb0] sm:$0xff]
        %v1942 = vld [vmem:[%s9 + $0xb8] sm:$0xff]
        %v1943 = vld [vmem:[%s9 + $0xc0] sm:$0xff]
        %v1944 = vld [vmem:[%s9 + $0xc8] sm:$0xff]
        %v1945 = vld [vmem:[%s9 + $0xd0] sm:$0xff]
        %v1946 = vld [vmem:[%s9 + $0xd8] sm:$0xff]
        %v1947 = vld [vmem:[%s9 + $0xe0] sm:$0xff]
        %v1948 = vld [vmem:[%s9 + $0xe8] sm:$0xff]
        %v1950 = vsel %vm1878, %v1938, 0
        %1952 = vmatpush.msra.mxu0 0.0
        %1953 = vmatpush.msra.mxu0 0.0
        %1954 = vmatpush.msra.mxu0 0.0
        %1955 = vmatpush.msra.mxu0 0.0
        %1956 = vmatpush.msra.mxu0 0.0
        %1957 = vmatpush.msra.mxu0 0.0
        %1958 = vmatpush.msra.mxu0 %v1948
        %1959 = vmatpush.msra.mxu0 %v1947
        %1960 = vmatpush.msra.mxu0 %v1946
        %1961 = vmatpush.msra.mxu0 %v1945
        %1962 = vmatpush.msra.mxu0 %v1944
        %1963 = vmatpush.msra.mxu0 %v1943
        %1964 = vmatpush.msra.mxu0 %v1942
        %1965 = vmatpush.msra.mxu0 %v1941
        %1966 = vmatpush.msra.mxu0 %v1940
        %1967 = vmatpush.msra.mxu0 %v1939
        %1968 = vmatmul.f32.gmra.mxu0 %v1950
        %v1969 = vpop.f32.mrf.mxu0
        %v1970 = vadd.f32 0.0, %v1969
        %1971 = vdwg.mxu0
        %v1972 = vadd.f32 %v1937, %v1970
        %v1973 = vld [vmem:[#allocation3 + $0x3] sm:$0x1]
        %v1974 = vld [vmem:[%s9 + $0xf0] sm:$0xff]
        %v1975 = vld [vmem:[%s9 + $0xf8] sm:$0xff]
        %v1976 = vld [vmem:[%s9 + $0x100] sm:$0xff]
        %v1977 = vld [vmem:[%s9 + $0x108] sm:$0xff]
        %v1978 = vld [vmem:[%s9 + $0x110] sm:$0xff]
        %v1979 = vld [vmem:[%s9 + $0x118] sm:$0xff]
        %v1980 = vld [vmem:[%s9 + $0x120] sm:$0xff]
        %v1981 = vld [vmem:[%s9 + $0x128] sm:$0xff]
        %v1982 = vld [vmem:[%s9 + $0x130] sm:$0xff]
        %v1983 = vld [vmem:[%s9 + $0x138] sm:$0xff]
        %v1985 = vsel %vm1878, %v1973, 0
        %1987 = vmatpush.msra.mxu0 0.0
        %1988 = vmatpush.msra.mxu0 0.0
        %1989 = vmatpush.msra.mxu0 0.0
        %1990 = vmatpush.msra.mxu0 0.0
        %1991 = vmatpush.msra.mxu0 0.0
        %1992 = vmatpush.msra.mxu0 0.0
        %1993 = vmatpush.msra.mxu0 %v1983
        %1994 = vmatpush.msra.mxu0 %v1982
        %1995 = vmatpush.msra.mxu0 %v1981
        %1996 = vmatpush.msra.mxu0 %v1980
        %1997 = vmatpush.msra.mxu0 %v1979
        %1998 = vmatpush.msra.mxu0 %v1978
        %1999 = vmatpush.msra.mxu0 %v1977
        %2000 = vmatpush.msra.mxu0 %v1976
        %2001 = vmatpush.msra.mxu0 %v1975
        %2002 = vmatpush.msra.mxu0 %v1974
        %2003 = vmatmul.f32.gmra.mxu0 %v1985
        %v2004 = vpop.f32.mrf.mxu0
        %v2005 = vadd.f32 0.0, %v2004
        %2006 = vdwg.mxu0
        %v2007 = vadd.f32 %v1972, %v2005
        %v2008 = vld [vmem:[#allocation3 + $0x4] sm:$0x1]
        %v2009 = vld [vmem:[%s9 + $0x140] sm:$0xff]
        %v2010 = vld [vmem:[%s9 + $0x148] sm:$0xff]
        %v2011 = vld [vmem:[%s9 + $0x150] sm:$0xff]
        %v2012 = vld [vmem:[%s9 + $0x158] sm:$0xff]
        %v2013 = vld [vmem:[%s9 + $0x160] sm:$0xff]
        %v2014 = vld [vmem:[%s9 + $0x168] sm:$0xff]
        %v2015 = vld [vmem:[%s9 + $0x170] sm:$0xff]
        %v2016 = vld [vmem:[%s9 + $0x178] sm:$0xff]
        %v2017 = vld [vmem:[%s9 + $0x180] sm:$0xff]
        %v2018 = vld [vmem:[%s9 + $0x188] sm:$0xff]
        %v2020 = vsel %vm1878, %v2008, 0
        %2022 = vmatpush.msra.mxu0 0.0
        %2023 = vmatpush.msra.mxu0 0.0
        %2024 = vmatpush.msra.mxu0 0.0
        %2025 = vmatpush.msra.mxu0 0.0
        %2026 = vmatpush.msra.mxu0 0.0
        %2027 = vmatpush.msra.mxu0 0.0
        %2028 = vmatpush.msra.mxu0 %v2018
        %2029 = vmatpush.msra.mxu0 %v2017
        %2030 = vmatpush.msra.mxu0 %v2016
        %2031 = vmatpush.msra.mxu0 %v2015
        %2032 = vmatpush.msra.mxu0 %v2014
        %2033 = vmatpush.msra.mxu0 %v2013
        %2034 = vmatpush.msra.mxu0 %v2012
        %2035 = vmatpush.msra.mxu0 %v2011
        %2036 = vmatpush.msra.mxu0 %v2010
        %2037 = vmatpush.msra.mxu0 %v2009
        %2038 = vmatmul.f32.gmra.mxu0 %v2020
        %v2039 = vpop.f32.mrf.mxu0
        %v2040 = vadd.f32 0.0, %v2039
        %2041 = vdwg.mxu0
        %v2042 = vadd.f32 %v2007, %v2040
        %v2043 = vsub.f32 0.0, %v2042
        %v2044 = vmul.f32 %v2043, 1.442695
        %v2045 = vpow.pop %v2044
        %v2046 = vadd.f32 %v2045, 1.0
        %v2047 = vrcp.pop %v2046
        %v2048 = vmul.f32 %v2046, %v2047
        %v2049 = vsub.f32 1.0, %v2048
        %v2050 = vmul.f32 %v2047, %v2049
        %v2051 = vadd.f32 %v2047, %v2050
        %vm2052 = vweird.f32 %v2046
        %vm2053 = vweird.f32 %v2047
        %vm2054 = vmor %vm2052, %vm2053
        %v2055 = vsel %vm2054, %v2047, %v2051
        %v2056 = vand.u32 2147483647, %v2046
        %vm2057 = vcmp.eq.f32.partialorder %v2056, 8.507059e+37
        %v2058 = vand.u32 %v2046, 2147483648
        %v2059 = vor.u32 1.1754944e-38, %v2058
        %v2060 = vsel %vm2057, %v2059, %v2055
        %v2061 = vmul.f32 1.0, %v2060
        %v2062 = vld [vmem:[%s11] sm:$0xff]
        %v2063 = vld [vmem:[%s11 + $0x8] sm:$0xff]
        %v2064 = vld [vmem:[%s11 + $0x10] sm:$0xff]
        %v2065 = vld [vmem:[%s11 + $0x18] sm:$0xff]
        %v2066 = vld [vmem:[%s11 + $0x20] sm:$0xff]
        %v2067 = vld [vmem:[%s11 + $0x28] sm:$0xff]
        %v2068 = vld [vmem:[%s11 + $0x30] sm:$0xff]
        %v2069 = vld [vmem:[%s11 + $0x38] sm:$0xff]
        %v2070 = vld [vmem:[%s11 + $0x40] sm:$0xff]
        %v2071 = vld [vmem:[%s11 + $0x48] sm:$0xff]
        %v2072 = vld [vmem:[%s11 + $0x50] sm:$0xff]
        %v2073 = vld [vmem:[%s11 + $0x58] sm:$0xff]
        %v2074 = vld [vmem:[%s11 + $0x60] sm:$0xff]
        %v2075 = vld [vmem:[%s11 + $0x68] sm:$0xff]
        %v2076 = vld [vmem:[%s11 + $0x70] sm:$0xff]
        %v2077 = vld [vmem:[%s12] sm:$0x1]
        %vm2078 = vcmask 982016
        %v2080 = vsel %vm2078, %v2061, 0
        %2082 = vmatpush.msra.mxu0 0.0
        %2083 = vmatpush.msra.mxu0 %v2076
        %2084 = vmatpush.msra.mxu0 %v2075
        %2085 = vmatpush.msra.mxu0 %v2074
        %2086 = vmatpush.msra.mxu0 %v2073
        %2087 = vmatpush.msra.mxu0 %v2072
        %2088 = vmatpush.msra.mxu0 %v2071
        %2089 = vmatpush.msra.mxu0 %v2070
        %2090 = vmatpush.msra.mxu0 %v2069
        %2091 = vmatpush.msra.mxu0 %v2068
        %2092 = vmatpush.msra.mxu0 %v2067
        %2093 = vmatpush.msra.mxu0 %v2066
        %2094 = vmatpush.msra.mxu0 %v2065
        %2095 = vmatpush.msra.mxu0 %v2064
        %2096 = vmatpush.msra.mxu0 %v2063
        %2097 = vmatpush.msra.mxu0 %v2062
        %2098 = vmatmul.f32.gmra.mxu0 %v2080
        %v2099 = vpop.f32.mrf.mxu0
        %v2100 = vadd.f32 %v2077, %v2099
        %2101 = vdwg.mxu0
        %v2102 = vsub.f32 0.0, %v2100
        %v2103 = vmul.f32 %v2102, 1.442695
        %v2104 = vpow.pop %v2103
        %v2105 = vadd.f32 %v2104, 1.0
        %v2106 = vrcp.pop %v2105
        %v2107 = vmul.f32 %v2105, %v2106
        %v2108 = vsub.f32 1.0, %v2107
        %v2109 = vmul.f32 %v2106, %v2108
        %v2110 = vadd.f32 %v2106, %v2109
        %vm2111 = vweird.f32 %v2105
        %vm2112 = vweird.f32 %v2106
        %vm2113 = vmor %vm2111, %vm2112
        %v2114 = vsel %vm2113, %v2106, %v2110
        %v2115 = vand.u32 2147483647, %v2105
        %vm2116 = vcmp.eq.f32.partialorder %v2115, 8.507059e+37
        %v2117 = vand.u32 %v2105, 2147483648
        %v2118 = vor.u32 1.1754944e-38, %v2117
        %v2119 = vsel %vm2116, %v2118, %v2114
        %v2120 = vmul.f32 1.0, %v2119
        %v2121 = vld [vmem:[%s13] sm:$0xff]
        %v2122 = vld [vmem:[%s13 + $0x8] sm:$0xff]
        %v2123 = vld [vmem:[%s13 + $0x10] sm:$0xff]
        %v2124 = vld [vmem:[%s13 + $0x18] sm:$0xff]
        %v2125 = vld [vmem:[%s13 + $0x20] sm:$0xff]
        %v2126 = vld [vmem:[%s13 + $0x28] sm:$0xff]
        %v2127 = vld [vmem:[%s13 + $0x30] sm:$0xff]
        %v2128 = vld [vmem:[%s13 + $0x38] sm:$0xff]
        %v2129 = vld [vmem:[%s13 + $0x40] sm:$0xff]
        %v2130 = vld [vmem:[%s13 + $0x48] sm:$0xff]
        %v2131 = vld [vmem:[%s13 + $0x50] sm:$0xf]
        %v2132 = vld [vmem:[%s14] sm:$0x1]
        %v2134 = vsel %vm1233, %v2120, 0
        %v2137 = vsel %vm1106, %v2131, 0
        %2139 = vmatpush.msra.mxu0 0.0
        %2140 = vmatpush.msra.mxu0 0.0
        %2141 = vmatpush.msra.mxu0 0.0
        %2142 = vmatpush.msra.mxu0 0.0
        %2143 = vmatpush.msra.mxu0 0.0
        %2144 = vmatpush.msra.mxu0 %v2137
        %2145 = vmatpush.msra.mxu0 %v2130
        %2146 = vmatpush.msra.mxu0 %v2129
        %2147 = vmatpush.msra.mxu0 %v2128
        %2148 = vmatpush.msra.mxu0 %v2127
        %2149 = vmatpush.msra.mxu0 %v2126
        %2150 = vmatpush.msra.mxu0 %v2125
        %2151 = vmatpush.msra.mxu0 %v2124
        %2152 = vmatpush.msra.mxu0 %v2123
        %2153 = vmatpush.msra.mxu0 %v2122
        %2154 = vmatpush.msra.mxu0 %v2121
        %2155 = vmatmul.f32.gmra.mxu0 %v2134
        %v2156 = vpop.f32.mrf.mxu0
        %v2157 = vadd.f32 %v2132, %v2156
        %2158 = vdwg.mxu0
        %vm2159 = vcmask 73728
        %v2160 = vsel %vm2159, %v2157, -inf
        %2161 = vmax.xlane.f32.xlu0 %v2160
        %v2162 = vpop.xlane.xlu0 %2161
        %v2163 = vsub.f32 %v2157, %v2162
        %v2164 = vmul.f32 %v2163, 1.442695
        %v2165 = vpow.pop %v2164
        %v2166 = vsel %vm2159, %v2165, 0.0
        %2167 = vadd.xlane.f32.xlu0 %v2166
        %v2168 = vpop.xlane.xlu0 %2167
        %v2169 = vrcp.pop %v2168
        %v2170 = vmul.f32 %v2168, %v2169
        %v2171 = vsub.f32 1.0, %v2170
        %v2172 = vmul.f32 %v2169, %v2171
        %v2173 = vadd.f32 %v2169, %v2172
        %vm2174 = vweird.f32 %v2168
        %vm2175 = vweird.f32 %v2169
        %vm2176 = vmor %vm2174, %vm2175
        %v2177 = vsel %vm2176, %v2169, %v2173
        %v2178 = vand.u32 2147483647, %v2168
        %vm2179 = vcmp.eq.f32.partialorder %v2178, 8.507059e+37
        %v2180 = vand.u32 %v2168, 2147483648
        %v2181 = vor.u32 1.1754944e-38, %v2180
        %v2182 = vsel %vm2179, %v2181, %v2177
        %v2183 = vmul.f32 %v2165, %v2182
        %2184 = vst.msk [vmem:[%s486] sm:$0x1] %vm2159, %v2183
        %s2185 = sand.u32 %s357, 1
        %s2186 = scalar_lea.sflag [#allocation5], %s2185
        %s2187 = sand.u32 %s357, 1
        %s2188 = scalar_lea.vmem [#allocation4], %s2187
        // Predicated region
        $region81: #{forward.1} parent=79 // pred_check
          %p2189 = pneg %p367
        $region82: #{forward.1} parent=79 // pred_check_branch
          %2191 = sbr.rel (%p2189) target = $region84
        $region83: #{forward.1} parent=79 // pred_region
          %2193 = vsyncadd %s2186, 0
          %s2194 = scalar_lea.hbm %s15, %s29
          %s2196 = sshll.u32 %s2188, 4
          %s2197 = int_to_ptr.vmem [resolvable:$true] %s2196
          %s2198 = sshll.u32 %s2194, 4
          %s2199 = int_to_ptr.hbm [resolvable:$true] %s2198
          %2201 = dma.vmem_to_hbm [thread:$0]  %s2197, 16, %s2199, %s2186
        $region84: #{forward.1} parent=79 // pred_fallthru
          _
      $region80: #{forward.1} parent=5 // pred_fallthru
        _
      %p2202 = scmp.le.s32.totalorder 2, %s24
      // Predicated region
      $region85: #{forward.1} parent=5 // pred_check
        %p2203 = pneg %p2202
      $region86: #{forward.1} parent=5 // pred_check_branch
        %2205 = sbr.rel (%p2203) target = $region88
      $region87: #{forward.1} parent=5 // pred_region
        %s2206 = ssub.s32 %s24, 2
        // Predicated region
        $region89: #{forward.1} parent=87 // pred_check
          %p2207 = pneg %p373
        $region90: #{forward.1} parent=87 // pred_check_branch
          %2209 = sbr.rel (%p2207) target = $region92
        $region91: #{forward.1} parent=87 // pred_region
          %s2210 = sand.u32 %s358, 1
          %s2211 = scalar_lea.sflag [#allocation5], %s2210
          %s2212 = sand.u32 %s358, 1
          %s2213 = scalar_lea.vmem [#allocation4], %s2212
          %2215 = dma.done %s2211, 16
        $region92: #{forward.1} parent=87 // pred_fallthru
          _
      $region88: #{forward.1} parent=5 // pred_fallthru
        _
    $region6: #{forward.1} parent=1 // loop_footer
      %s28 = sadd.s32 1, %s24
    $region7: #{forward.1} parent=1 // loop_footer_branch
      %23 = sbr.rel target = $region3
    $region8: #{forward.1} parent=1 // loop_exit
      _
    %2216 = vsyncpa [#allocation5], 1
    %s2217 = scalar_lea.sflag [#allocation5], 1
    %2218 = vsyncpa %s2217, 1

</llo_original>
